<compile_context>
chip_gen: v6e
topology: v6e:2x2x1
jax: 0.10.0
libtpu: 0.0.40
codegen_flags: <defaults>
</compile_context>

<pallas_src>
import jax
import jax.numpy as jnp
from jax.experimental import pallas as pl
from jax.experimental.pallas import tpu as pltpu

LEAKY_SLOPE = 0.2
KSIZE = 7
PAD = 3
N_UP_LAYERS = 3  # log2(32) - log2(4)


def _leaky(x):
    return jnp.where(x > 0, x, LEAKY_SLOPE * x)


def _full_spec(shape):
    n = len(shape)
    return pl.BlockSpec(shape, lambda i, _n=n: (0,) * _n)


# ---------------------------------------------------------------------------
# Fused kernel: expand MLP + 3 folded (upsample+conv+leaky) layers.
# Activations are lane-dense 2-D (B, L*C), position-major columns (l*C + c).
# ---------------------------------------------------------------------------
def conv_expander_kernel(x_ref, w1, b1, w2, b2, w3, b3, w4p, b4p,
                         d1, c1, d2, c2, d3, c3, o_ref):
    # expand MLP: 3 x [Linear(C,C) + LeakyReLU] + Linear(C, 4C)
    h = x_ref[...].astype(jnp.float32)                                  # (B, C)
    for w, b in ((w1, b1), (w2, b2), (w3, b3)):
        h = _leaky(jnp.dot(h, w[...], preferred_element_type=jnp.float32) + b[...])
    # final expand linear; columns pre-permuted so (B, 4C) is already the
    # position-major lane-blocked layout the first folded conv consumes.
    h = jnp.dot(h, w4p[...], preferred_element_type=jnp.float32) + b4p[...]  # (B, 4C)

    # 3 x [nearest-x2 upsample -> Conv1d(k=7, pad=3) -> LeakyReLU], each folded
    # into a single dense matmul: (B, L*C) @ (L*C, 2L*C).  K = 128 / 256 / 512.
    for d, c in ((d1, c1), (d2, c2), (d3, c3)):
        h = _leaky(jnp.dot(h, d[...], preferred_element_type=jnp.float32) + c[...])

    o_ref[...] = h.astype(o_ref.dtype)          # (B, 32*C): lane-dense store


# ---------------------------------------------------------------------------
# One-time host-side weight packing (outside the forward pass).
# ---------------------------------------------------------------------------
def _fold_upsample_conv(w, L, C):
    """Fold [nearest-x2 upsample -> Conv1d(C, C, 7, 1, 3)] over an input of
    length L into a dense (L*C, 2L*C) matrix acting on position-major columns.

    On the x2-upsampled signal the 7-tap conv splits into two 4-tap phase
    convolutions over the original samples:
      y[2i]   = w0*x[i-2] + (w1+w2)*x[i-1] + (w3+w4)*x[i]   + (w5+w6)*x[i+1]
      y[2i+1] = (w0+w1)*x[i-1] + (w2+w3)*x[i] + (w4+w5)*x[i+1] + w6*x[i+2]
    """
    taps = {
        (0, -2): w[0],          (0, -1): w[1] + w[2],
        (0,  0): w[3] + w[4],   (0,  1): w[5] + w[6],
        (1, -1): w[0] + w[1],   (1,  0): w[2] + w[3],
        (1,  1): w[4] + w[5],   (1,  2): w[6],
    }
    dense = jnp.zeros((L * C, 2 * L * C), w.dtype)
    for (p, s), wm in taps.items():
        place = jnp.zeros((L, 2 * L), w.dtype)
        for l in range(L):
            i = l - s                       # output base index fed by input l
            if 0 <= i < L:
                place = place.at[l, 2 * i + p].set(1.0)
        dense = dense + jnp.kron(place, wm)   # block (l, t) gets wm
    return dense


def pack_params(mlp_params, conv_params, channels):
    C = channels
    (w1, b1), (w2, b2), (w3, b3), (w4, b4) = mlp_params

    # Permute the last expand-linear's columns from PyTorch's .view(B, C, 4)
    # order (c*4 + l) to position-major (l*C + c).
    w4p = w4.reshape(C, C, 4).transpose(0, 2, 1).reshape(C, 4 * C)
    b4p = b4.reshape(1, C, 4).transpose(0, 2, 1).reshape(1, 4 * C)

    packed = [w1, b1, w2, b2, w3, b3, w4p, b4p]
    L = 4
    for idx, (w, b) in enumerate(conv_params):            # w: (7, Cin, Cout)
        dense = _fold_upsample_conv(w, L, C)               # (L*C, 2L*C)
        bias = jnp.tile(b, (1, 2 * L))                     # cols = t*C + c
        if idx == len(conv_params) - 1:
            # Permute final columns (t*C + c) -> (c*2L + t) so the kernel's 2-D
            # output reshapes (zero-copy) to the module's NCL (B, C, 32).
            dense = dense.reshape(L * C, 2 * L, C).transpose(0, 2, 1)
            dense = dense.reshape(L * C, 2 * L * C)
            bias = bias.reshape(1, 2 * L, C).transpose(0, 2, 1).reshape(1, 2 * L * C)
        packed += [dense, bias]
        L *= 2
    return tuple(packed)


# ---------------------------------------------------------------------------
# Forward: one pallas_call, one zero-copy reshape back to NCL.
# ---------------------------------------------------------------------------
def conv_expander_forward(x, packed_params):
    B, C = x.shape
    args = (x,) + tuple(packed_params)
    out2d = pl.pallas_call(
        conv_expander_kernel,
        out_shape=jax.ShapeDtypeStruct((B, C * 32), x.dtype),
        grid=(1,),
        in_specs=[_full_spec(a.shape) for a in args],
        out_specs=_full_spec((B, C * 32)),
        compiler_params=pltpu.CompilerParams(
            dimension_semantics=("arbitrary",)),
    )(*args)
    # Columns were packed as c*32 + t, so this is a zero-copy row-major view.
    return out2d.reshape(B, C, 32)


# ---------------------------------------------------------------------------
# Pure-JAX reference (independent math: lax.conv_general_dilated)
# ---------------------------------------------------------------------------
def reference_forward(x, mlp_params, conv_params):
    B, C = x.shape
    h = x
    for i, (w, b) in enumerate(mlp_params):
        h = h @ w + b
        if i < 3:
            h = _leaky(h)
    h = h.reshape(B, C, 4)                                    # NCL
    for (w, b) in conv_params:
        h = jnp.repeat(h, 2, axis=2)                          # nearest x2
        w_oik = jnp.transpose(w, (2, 1, 0))                   # (Cout, Cin, K)
        h = jax.lax.conv_general_dilated(
            h, w_oik, window_strides=(1,), padding=[(PAD, PAD)],
            dimension_numbers=("NCH", "OIH", "NCH"))
        h = h + b[0][None, :, None]
        h = _leaky(h)
    return h


# ---------------------------------------------------------------------------
# Deterministic parameter construction
# ---------------------------------------------------------------------------
def init_params(key, channels):
    def linear(k, cin, cout):
        k1, k2 = jax.random.split(k)
        s = 1.0 / jnp.sqrt(cin)
        return (jax.random.uniform(k1, (cin, cout), jnp.float32, -s, s),
                jax.random.uniform(k2, (1, cout), jnp.float32, -s, s))

    keys = jax.random.split(key, 4 + N_UP_LAYERS)
    mlp = [linear(keys[0], channels, channels),
           linear(keys[1], channels, channels),
           linear(keys[2], channels, channels),
           linear(keys[3], channels, channels * 4)]

    conv = []
    for i in range(N_UP_LAYERS):
        k1, k2 = jax.random.split(keys[4 + i])
        s = 1.0 / jnp.sqrt(channels * KSIZE)
        w = jax.random.uniform(k1, (KSIZE, channels, channels), jnp.float32, -s, s)
        b = jax.random.uniform(k2, (1, channels), jnp.float32, -s, s)
        conv.append((w, b))
    return mlp, conv


if __name__ == "__main__":
    B, C = 2, 32
    key = jax.random.PRNGKey(0)
    kp, kx = jax.random.split(key)
    mlp_params, conv_params = init_params(kp, C)
    x = jax.random.normal(kx, (B, C), jnp.float32)

    packed = pack_params(mlp_params, conv_params, C)   # one-time weight prep
    out = conv_expander_forward(x, packed)
    out = jax.block_until_ready(out)

    ref = reference_forward(x, mlp_params, conv_params)
    assert out.shape == (B, C, 32), out.shape
    assert jnp.allclose(out, ref, atol=1e-4, rtol=1e-4), "mismatch vs reference"
    print("KERNEL_OK")
</pallas_src>

<mosaic_0001>
module attributes {stable_mosaic.version = 11 : i64} {
  func.func @conv_expander_kernel(%arg0: i32, %arg1: memref<2x32xf32, #tpu.memory_space<vmem>>, %arg2: memref<32x32xf32, #tpu.memory_space<vmem>>, %arg3: memref<1x32xf32, #tpu.memory_space<vmem>>, %arg4: memref<32x32xf32, #tpu.memory_space<vmem>>, %arg5: memref<1x32xf32, #tpu.memory_space<vmem>>, %arg6: memref<32x32xf32, #tpu.memory_space<vmem>>, %arg7: memref<1x32xf32, #tpu.memory_space<vmem>>, %arg8: memref<32x128xf32, #tpu.memory_space<vmem>>, %arg9: memref<1x128xf32, #tpu.memory_space<vmem>>, %arg10: memref<128x256xf32, #tpu.memory_space<vmem>>, %arg11: memref<1x256xf32, #tpu.memory_space<vmem>>, %arg12: memref<256x512xf32, #tpu.memory_space<vmem>>, %arg13: memref<1x512xf32, #tpu.memory_space<vmem>>, %arg14: memref<512x1024xf32, #tpu.memory_space<vmem>>, %arg15: memref<1x1024xf32, #tpu.memory_space<vmem>>, %arg16: memref<2x1024xf32, #tpu.memory_space<vmem>>) attributes {dimension_semantics = [#tpu.dimension_semantics<arbitrary>], iteration_bounds = array<i64: 1>, scalar_prefetch = 0 : i64, scratch_operands = 0 : i64, tpu.core_type = #tpu.core_type<tc>, window_params = [{pipeline_mode = #tpu.pipeline_mode<synchronous>, transform_indices = @transform_0, window_bounds = array<i64: 2, 32>}, {pipeline_mode = #tpu.pipeline_mode<synchronous>, transform_indices = @transform_1, window_bounds = array<i64: 32, 32>}, {pipeline_mode = #tpu.pipeline_mode<synchronous>, transform_indices = @transform_2, window_bounds = array<i64: 1, 32>}, {pipeline_mode = #tpu.pipeline_mode<synchronous>, transform_indices = @transform_3, window_bounds = array<i64: 32, 32>}, {pipeline_mode = #tpu.pipeline_mode<synchronous>, transform_indices = @transform_4, window_bounds = array<i64: 1, 32>}, {pipeline_mode = #tpu.pipeline_mode<synchronous>, transform_indices = @transform_5, window_bounds = array<i64: 32, 32>}, {pipeline_mode = #tpu.pipeline_mode<synchronous>, transform_indices = @transform_6, window_bounds = array<i64: 1, 32>}, {pipeline_mode = #tpu.pipeline_mode<synchronous>, transform_indices = @transform_7, window_bounds = array<i64: 32, 128>}, {pipeline_mode = #tpu.pipeline_mode<synchronous>, transform_indices = @transform_8, window_bounds = array<i64: 1, 128>}, {pipeline_mode = #tpu.pipeline_mode<synchronous>, transform_indices = @transform_9, window_bounds = array<i64: 128, 256>}, {pipeline_mode = #tpu.pipeline_mode<synchronous>, transform_indices = @transform_10, window_bounds = array<i64: 1, 256>}, {pipeline_mode = #tpu.pipeline_mode<synchronous>, transform_indices = @transform_11, window_bounds = array<i64: 256, 512>}, {pipeline_mode = #tpu.pipeline_mode<synchronous>, transform_indices = @transform_12, window_bounds = array<i64: 1, 512>}, {pipeline_mode = #tpu.pipeline_mode<synchronous>, transform_indices = @transform_13, window_bounds = array<i64: 512, 1024>}, {pipeline_mode = #tpu.pipeline_mode<synchronous>, transform_indices = @transform_14, window_bounds = array<i64: 1, 1024>}, {pipeline_mode = #tpu.pipeline_mode<synchronous>, transform_indices = @transform_15, window_bounds = array<i64: 2, 1024>}]} {
    %c0 = arith.constant 0 : index
    %c0_0 = arith.constant 0 : index
    %0 = vector.load %arg1[%c0, %c0_0] : memref<2x32xf32, #tpu.memory_space<vmem>>, vector<2x32xf32>
    %c0_1 = arith.constant 0 : index
    %c0_2 = arith.constant 0 : index
    %1 = vector.load %arg2[%c0_1, %c0_2] : memref<32x32xf32, #tpu.memory_space<vmem>>, vector<32x32xf32>
    %cst = arith.constant dense<0.000000e+00> : vector<2x32xf32>
    %2 = tpu.matmul %0, %1, %cst {dimension_numbers = #tpu.dot_dimension_numbers<[1], [0], [0], [1], [0, 0, 1, 1], [], []>} : vector<2x32xf32>, vector<32x32xf32>, vector<2x32xf32> -> vector<2x32xf32>
    %c0_3 = arith.constant 0 : index
    %c0_4 = arith.constant 0 : index
    %3 = vector.load %arg3[%c0_3, %c0_4] : memref<1x32xf32, #tpu.memory_space<vmem>>, vector<1x32xf32>
    %4 = vector.broadcast %3 : vector<1x32xf32> to vector<2x32xf32>
    %5 = arith.addf %2, %4 : vector<2x32xf32>
    %cst_5 = arith.constant 0.000000e+00 : f32
    %6 = vector.broadcast %cst_5 : f32 to vector<2x32xf32>
    %7 = arith.cmpf ogt, %5, %6 : vector<2x32xf32>
    %cst_6 = arith.constant 2.000000e-01 : f32
    %8 = vector.broadcast %cst_6 : f32 to vector<2x32xf32>
    %9 = arith.mulf %8, %5 : vector<2x32xf32>
    %10 = arith.select %7, %5, %9 : vector<2x32xi1>, vector<2x32xf32>
    %c0_7 = arith.constant 0 : index
    %c0_8 = arith.constant 0 : index
    %11 = vector.load %arg4[%c0_7, %c0_8] : memref<32x32xf32, #tpu.memory_space<vmem>>, vector<32x32xf32>
    %cst_9 = arith.constant dense<0.000000e+00> : vector<2x32xf32>
    %12 = tpu.matmul %10, %11, %cst_9 {dimension_numbers = #tpu.dot_dimension_numbers<[1], [0], [0], [1], [0, 0, 1, 1], [], []>} : vector<2x32xf32>, vector<32x32xf32>, vector<2x32xf32> -> vector<2x32xf32>
    %c0_10 = arith.constant 0 : index
    %c0_11 = arith.constant 0 : index
    %13 = vector.load %arg5[%c0_10, %c0_11] : memref<1x32xf32, #tpu.memory_space<vmem>>, vector<1x32xf32>
    %14 = vector.broadcast %13 : vector<1x32xf32> to vector<2x32xf32>
    %15 = arith.addf %12, %14 : vector<2x32xf32>
    %cst_12 = arith.constant 0.000000e+00 : f32
    %16 = vector.broadcast %cst_12 : f32 to vector<2x32xf32>
    %17 = arith.cmpf ogt, %15, %16 : vector<2x32xf32>
    %cst_13 = arith.constant 2.000000e-01 : f32
    %18 = vector.broadcast %cst_13 : f32 to vector<2x32xf32>
    %19 = arith.mulf %18, %15 : vector<2x32xf32>
    %20 = arith.select %17, %15, %19 : vector<2x32xi1>, vector<2x32xf32>
    %c0_14 = arith.constant 0 : index
    %c0_15 = arith.constant 0 : index
    %21 = vector.load %arg6[%c0_14, %c0_15] : memref<32x32xf32, #tpu.memory_space<vmem>>, vector<32x32xf32>
    %cst_16 = arith.constant dense<0.000000e+00> : vector<2x32xf32>
    %22 = tpu.matmul %20, %21, %cst_16 {dimension_numbers = #tpu.dot_dimension_numbers<[1], [0], [0], [1], [0, 0, 1, 1], [], []>} : vector<2x32xf32>, vector<32x32xf32>, vector<2x32xf32> -> vector<2x32xf32>
    %c0_17 = arith.constant 0 : index
    %c0_18 = arith.constant 0 : index
    %23 = vector.load %arg7[%c0_17, %c0_18] : memref<1x32xf32, #tpu.memory_space<vmem>>, vector<1x32xf32>
    %24 = vector.broadcast %23 : vector<1x32xf32> to vector<2x32xf32>
    %25 = arith.addf %22, %24 : vector<2x32xf32>
    %cst_19 = arith.constant 0.000000e+00 : f32
    %26 = vector.broadcast %cst_19 : f32 to vector<2x32xf32>
    %27 = arith.cmpf ogt, %25, %26 : vector<2x32xf32>
    %cst_20 = arith.constant 2.000000e-01 : f32
    %28 = vector.broadcast %cst_20 : f32 to vector<2x32xf32>
    %29 = arith.mulf %28, %25 : vector<2x32xf32>
    %30 = arith.select %27, %25, %29 : vector<2x32xi1>, vector<2x32xf32>
    %c0_21 = arith.constant 0 : index
    %c0_22 = arith.constant 0 : index
    %31 = vector.load %arg8[%c0_21, %c0_22] : memref<32x128xf32, #tpu.memory_space<vmem>>, vector<32x128xf32>
    %cst_23 = arith.constant dense<0.000000e+00> : vector<2x128xf32>
    %32 = tpu.matmul %30, %31, %cst_23 {dimension_numbers = #tpu.dot_dimension_numbers<[1], [0], [0], [1], [0, 0, 1, 1], [], []>} : vector<2x32xf32>, vector<32x128xf32>, vector<2x128xf32> -> vector<2x128xf32>
    %c0_24 = arith.constant 0 : index
    %c0_25 = arith.constant 0 : index
    %33 = vector.load %arg9[%c0_24, %c0_25] : memref<1x128xf32, #tpu.memory_space<vmem>>, vector<1x128xf32>
    %34 = vector.broadcast %33 : vector<1x128xf32> to vector<2x128xf32>
    %35 = arith.addf %32, %34 : vector<2x128xf32>
    %c0_26 = arith.constant 0 : index
    %c0_27 = arith.constant 0 : index
    %36 = vector.load %arg10[%c0_26, %c0_27] : memref<128x256xf32, #tpu.memory_space<vmem>>, vector<128x256xf32>
    %cst_28 = arith.constant dense<0.000000e+00> : vector<2x256xf32>
    %37 = tpu.matmul %35, %36, %cst_28 {dimension_numbers = #tpu.dot_dimension_numbers<[1], [0], [0], [1], [0, 0, 1, 1], [], []>} : vector<2x128xf32>, vector<128x256xf32>, vector<2x256xf32> -> vector<2x256xf32>
    %c0_29 = arith.constant 0 : index
    %c0_30 = arith.constant 0 : index
    %38 = vector.load %arg11[%c0_29, %c0_30] : memref<1x256xf32, #tpu.memory_space<vmem>>, vector<1x256xf32>
    %39 = vector.broadcast %38 : vector<1x256xf32> to vector<2x256xf32>
    %40 = arith.addf %37, %39 : vector<2x256xf32>
    %cst_31 = arith.constant 0.000000e+00 : f32
    %41 = vector.broadcast %cst_31 : f32 to vector<2x256xf32>
    %42 = arith.cmpf ogt, %40, %41 : vector<2x256xf32>
    %cst_32 = arith.constant 2.000000e-01 : f32
    %43 = vector.broadcast %cst_32 : f32 to vector<2x256xf32>
    %44 = arith.mulf %43, %40 : vector<2x256xf32>
    %45 = arith.select %42, %40, %44 : vector<2x256xi1>, vector<2x256xf32>
    %c0_33 = arith.constant 0 : index
    %c0_34 = arith.constant 0 : index
    %46 = vector.load %arg12[%c0_33, %c0_34] : memref<256x512xf32, #tpu.memory_space<vmem>>, vector<256x512xf32>
    %cst_35 = arith.constant dense<0.000000e+00> : vector<2x512xf32>
    %47 = tpu.matmul %45, %46, %cst_35 {dimension_numbers = #tpu.dot_dimension_numbers<[1], [0], [0], [1], [0, 0, 1, 1], [], []>} : vector<2x256xf32>, vector<256x512xf32>, vector<2x512xf32> -> vector<2x512xf32>
    %c0_36 = arith.constant 0 : index
    %c0_37 = arith.constant 0 : index
    %48 = vector.load %arg13[%c0_36, %c0_37] : memref<1x512xf32, #tpu.memory_space<vmem>>, vector<1x512xf32>
    %49 = vector.broadcast %48 : vector<1x512xf32> to vector<2x512xf32>
    %50 = arith.addf %47, %49 : vector<2x512xf32>
    %cst_38 = arith.constant 0.000000e+00 : f32
    %51 = vector.broadcast %cst_38 : f32 to vector<2x512xf32>
    %52 = arith.cmpf ogt, %50, %51 : vector<2x512xf32>
    %cst_39 = arith.constant 2.000000e-01 : f32
    %53 = vector.broadcast %cst_39 : f32 to vector<2x512xf32>
    %54 = arith.mulf %53, %50 : vector<2x512xf32>
    %55 = arith.select %52, %50, %54 : vector<2x512xi1>, vector<2x512xf32>
    %c0_40 = arith.constant 0 : index
    %c0_41 = arith.constant 0 : index
    %56 = vector.load %arg14[%c0_40, %c0_41] : memref<512x1024xf32, #tpu.memory_space<vmem>>, vector<512x1024xf32>
    %cst_42 = arith.constant dense<0.000000e+00> : vector<2x1024xf32>
    %57 = tpu.matmul %55, %56, %cst_42 {dimension_numbers = #tpu.dot_dimension_numbers<[1], [0], [0], [1], [0, 0, 1, 1], [], []>} : vector<2x512xf32>, vector<512x1024xf32>, vector<2x1024xf32> -> vector<2x1024xf32>
    %c0_43 = arith.constant 0 : index
    %c0_44 = arith.constant 0 : index
    %58 = vector.load %arg15[%c0_43, %c0_44] : memref<1x1024xf32, #tpu.memory_space<vmem>>, vector<1x1024xf32>
    %59 = vector.broadcast %58 : vector<1x1024xf32> to vector<2x1024xf32>
    %60 = arith.addf %57, %59 : vector<2x1024xf32>
    %cst_45 = arith.constant 0.000000e+00 : f32
    %61 = vector.broadcast %cst_45 : f32 to vector<2x1024xf32>
    %62 = arith.cmpf ogt, %60, %61 : vector<2x1024xf32>
    %cst_46 = arith.constant 2.000000e-01 : f32
    %63 = vector.broadcast %cst_46 : f32 to vector<2x1024xf32>
    %64 = arith.mulf %63, %60 : vector<2x1024xf32>
    %65 = arith.select %62, %60, %64 : vector<2x1024xi1>, vector<2x1024xf32>
    %c0_47 = arith.constant 0 : index
    %c0_48 = arith.constant 0 : index
    %66 = vector.load %arg16[%c0_47, %c0_48] : memref<2x1024xf32, #tpu.memory_space<vmem>>, vector<2x1024xf32>
    tpu.vector_store %arg16[%c0_47, %c0_48], %65 {strides = array<i32>} : memref<2x1024xf32, #tpu.memory_space<vmem>>, vector<2x1024xf32>,
    return
  }
  func.func @transform_0(%arg0: i32) -> (i32, i32) {
    %c0_i32 = arith.constant 0 : i32
    %c0_i32_0 = arith.constant 0 : i32
    %c0_i32_1 = arith.constant 0 : i32
    return %c0_i32, %c0_i32_0 : i32, i32
  }
  func.func @transform_1(%arg0: i32) -> (i32, i32) {
    %c0_i32 = arith.constant 0 : i32
    %c0_i32_0 = arith.constant 0 : i32
    %c0_i32_1 = arith.constant 0 : i32
    return %c0_i32, %c0_i32_0 : i32, i32
  }
  func.func @transform_2(%arg0: i32) -> (i32, i32) {
    %c0_i32 = arith.constant 0 : i32
    %c0_i32_0 = arith.constant 0 : i32
    %c0_i32_1 = arith.constant 0 : i32
    return %c0_i32, %c0_i32_0 : i32, i32
  }
  func.func @transform_3(%arg0: i32) -> (i32, i32) {
    %c0_i32 = arith.constant 0 : i32
    %c0_i32_0 = arith.constant 0 : i32
    %c0_i32_1 = arith.constant 0 : i32
    return %c0_i32, %c0_i32_0 : i32, i32
  }
  func.func @transform_4(%arg0: i32) -> (i32, i32) {
    %c0_i32 = arith.constant 0 : i32
    %c0_i32_0 = arith.constant 0 : i32
    %c0_i32_1 = arith.constant 0 : i32
    return %c0_i32, %c0_i32_0 : i32, i32
  }
  func.func @transform_5(%arg0: i32) -> (i32, i32) {
    %c0_i32 = arith.constant 0 : i32
    %c0_i32_0 = arith.constant 0 : i32
    %c0_i32_1 = arith.constant 0 : i32
    return %c0_i32, %c0_i32_0 : i32, i32
  }
  func.func @transform_6(%arg0: i32) -> (i32, i32) {
    %c0_i32 = arith.constant 0 : i32
    %c0_i32_0 = arith.constant 0 : i32
    %c0_i32_1 = arith.constant 0 : i32
    return %c0_i32, %c0_i32_0 : i32, i32
  }
  func.func @transform_7(%arg0: i32) -> (i32, i32) {
    %c0_i32 = arith.constant 0 : i32
    %c0_i32_0 = arith.constant 0 : i32
    %c0_i32_1 = arith.constant 0 : i32
    return %c0_i32, %c0_i32_0 : i32, i32
  }
  func.func @transform_8(%arg0: i32) -> (i32, i32) {
    %c0_i32 = arith.constant 0 : i32
    %c0_i32_0 = arith.constant 0 : i32
    %c0_i32_1 = arith.constant 0 : i32
    return %c0_i32, %c0_i32_0 : i32, i32
  }
  func.func @transform_9(%arg0: i32) -> (i32, i32) {
    %c0_i32 = arith.constant 0 : i32
    %c0_i32_0 = arith.constant 0 : i32
    %c0_i32_1 = arith.constant 0 : i32
    return %c0_i32, %c0_i32_0 : i32, i32
  }
  func.func @transform_10(%arg0: i32) -> (i32, i32) {
    %c0_i32 = arith.constant 0 : i32
    %c0_i32_0 = arith.constant 0 : i32
    %c0_i32_1 = arith.constant 0 : i32
    return %c0_i32, %c0_i32_0 : i32, i32
  }
  func.func @transform_11(%arg0: i32) -> (i32, i32) {
    %c0_i32 = arith.constant 0 : i32
    %c0_i32_0 = arith.constant 0 : i32
    %c0_i32_1 = arith.constant 0 : i32
    return %c0_i32, %c0_i32_0 : i32, i32
  }
  func.func @transform_12(%arg0: i32) -> (i32, i32) {
    %c0_i32 = arith.constant 0 : i32
    %c0_i32_0 = arith.constant 0 : i32
    %c0_i32_1 = arith.constant 0 : i32
    return %c0_i32, %c0_i32_0 : i32, i32
  }
  func.func @transform_13(%arg0: i32) -> (i32, i32) {
    %c0_i32 = arith.constant 0 : i32
    %c0_i32_0 = arith.constant 0 : i32
    %c0_i32_1 = arith.constant 0 : i32
    return %c0_i32, %c0_i32_0 : i32, i32
  }
  func.func @transform_14(%arg0: i32) -> (i32, i32) {
    %c0_i32 = arith.constant 0 : i32
    %c0_i32_0 = arith.constant 0 : i32
    %c0_i32_1 = arith.constant 0 : i32
    return %c0_i32, %c0_i32_0 : i32, i32
  }
  func.func @transform_15(%arg0: i32) -> (i32, i32) {
    %c0_i32 = arith.constant 0 : i32
    %c0_i32_0 = arith.constant 0 : i32
    %c0_i32_1 = arith.constant 0 : i32
    return %c0_i32, %c0_i32_0 : i32, i32
  }
}

</mosaic_0001>

<llo_original>
// kernel: tpu_custom_call.1
$region0: #{tpu_custom_call.1}
  #allocation0 [shape = 'u32[]', space=smem, size = 0x4, offset = 0x4, fixed_abs, tag = 'smem constant byte address 0x4 - core index']
  #allocation1 [shape = 'u32[144,128]{1,0:T(1,128)}', space=vmem, size = 0x12000, scoped, tag = 'internal scratch']
  %s0 = inlined_call_operand.hbm [shape: f32[2,32], index: 0, kind: input, shape index: {}]
  %s1 = inlined_call_operand.hbm [shape: f32[32,32], index: 1, kind: input, shape index: {}]
  %s2 = inlined_call_operand.hbm [shape: f32[1,32], index: 2, kind: input, shape index: {}]
  %s3 = inlined_call_operand.hbm [shape: f32[32,32], index: 3, kind: input, shape index: {}]
  %s4 = inlined_call_operand.hbm [shape: f32[1,32], index: 4, kind: input, shape index: {}]
  %s5 = inlined_call_operand.hbm [shape: f32[32,32], index: 5, kind: input, shape index: {}]
  %s6 = inlined_call_operand.hbm [shape: f32[1,32], index: 6, kind: input, shape index: {}]
  %s7 = inlined_call_operand.hbm [shape: f32[32,128], index: 7, kind: input, shape index: {}]
  %s8 = inlined_call_operand.hbm [shape: f32[1,128], index: 8, kind: input, shape index: {}]
  %s9 = inlined_call_operand.hbm [shape: f32[128,256], index: 9, kind: input, shape index: {}]
  %s10 = inlined_call_operand.hbm [shape: f32[1,256], index: 10, kind: input, shape index: {}]
  %s11 = inlined_call_operand.hbm [shape: f32[256,512], index: 11, kind: input, shape index: {}]
  %s12 = inlined_call_operand.hbm [shape: f32[1,512], index: 12, kind: input, shape index: {}]
  %s13 = inlined_call_operand.hbm [shape: f32[512,1024], index: 13, kind: input, shape index: {}]
  %s14 = inlined_call_operand.hbm [shape: f32[1,1024], index: 14, kind: input, shape index: {}]
  %s15 = inlined_call_operand.hbm [shape: f32[2,1024], index: 15, kind: output, shape index: {}]
  %s16 = sld [smem:[#allocation0]]
  $region130: #{tpu_custom_call.1} parent=0
    _
  %s18 = ssub.s32 1, %s16
  %s19 = scalar_select 0, %s18, %s16
  $region1: #{tpu_custom_call.1} parent=0
    #allocation2 [shape = 'u8[1024]{0}', space=vmem, size = 0x400, scoped, tag = 'input window, operand 0, single buffered']
    #allocation3 [shape = 's32[1]{0}', space=sflag, size = 0x4, scoped, tag = 'scoped memory for tpu_custom_call.1']
    #allocation4 [shape = 's32[1]{0}', space=sflag, size = 0x4, scoped, tag = 'scoped memory for tpu_custom_call.1']
    #allocation5 [shape = 'u8[16384]{0}', space=vmem, size = 0x4000, scoped, tag = 'input window, operand 1, single buffered']
    #allocation6 [shape = 's32[1]{0}', space=sflag, size = 0x4, scoped, tag = 'scoped memory for tpu_custom_call.1']
    #allocation7 [shape = 'u8[512]{0}', space=vmem, size = 0x400, scoped, tag = 'input window, operand 2, single buffered']
    #allocation8 [shape = 'u8[16384]{0}', space=vmem, size = 0x4000, scoped, tag = 'input window, operand 3, single buffered']
    #allocation9 [shape = 's32[1]{0}', space=sflag, size = 0x4, scoped, tag = 'scoped memory for tpu_custom_call.1']
    #allocation10 [shape = 'u8[512]{0}', space=vmem, size = 0x400, scoped, tag = 'input window, operand 4, single buffered']
    #allocation11 [shape = 'u8[16384]{0}', space=vmem, size = 0x4000, scoped, tag = 'input window, operand 5, single buffered']
    #allocation12 [shape = 's32[1]{0}', space=sflag, size = 0x4, scoped, tag = 'scoped memory for tpu_custom_call.1']
    #allocation13 [shape = 'u8[512]{0}', space=vmem, size = 0x400, scoped, tag = 'input window, operand 6, single buffered']
    #allocation14 [shape = 'u8[16384]{0}', space=vmem, size = 0x4000, scoped, tag = 'input window, operand 7, single buffered']
    #allocation15 [shape = 's32[1]{0}', space=sflag, size = 0x4, scoped, tag = 'scoped memory for tpu_custom_call.1']
    #allocation16 [shape = 'u8[512]{0}', space=vmem, size = 0x400, scoped, tag = 'input window, operand 8, single buffered']
    #allocation17 [shape = 'u8[131072]{0}', space=vmem, size = 0x20000, scoped, tag = 'input window, operand 9, single buffered']
    #allocation18 [shape = 's32[1]{0}', space=sflag, size = 0x4, scoped, tag = 'scoped memory for tpu_custom_call.1']
    #allocation19 [shape = 'u8[1024]{0}', space=vmem, size = 0x400, scoped, tag = 'input window, operand 10, single buffered']
    #allocation20 [shape = 'u8[524288]{0}', space=vmem, size = 0x80000, scoped, tag = 'input window, operand 11, single buffered']
    #allocation21 [shape = 's32[1]{0}', space=sflag, size = 0x4, scoped, tag = 'scoped memory for tpu_custom_call.1']
    #allocation22 [shape = 'u8[2048]{0}', space=vmem, size = 0x800, scoped, tag = 'input window, operand 12, single buffered']
    #allocation23 [shape = 'u8[2097152]{0}', space=vmem, size = 0x200000, scoped, tag = 'input window, operand 13, single buffered']
    #allocation24 [shape = 's32[1]{0}', space=sflag, size = 0x4, scoped, tag = 'scoped memory for tpu_custom_call.1']
    #allocation25 [shape = 'u8[4096]{0}', space=vmem, size = 0x1000, scoped, tag = 'input window, operand 14, single buffered']
    #allocation26 [shape = 'u8[8192]{0}', space=vmem, size = 0x2000, scoped, tag = 'output window, operand 0, single buffered']
    %20 = vsyncpa [#allocation3], 0
    %21 = vsyncpa [#allocation6], 0
    %22 = vsyncpa [#allocation9], 0
    %23 = vsyncpa [#allocation12], 0
    %24 = vsyncpa [#allocation15], 0
    %25 = vsyncpa [#allocation18], 0
    %26 = vsyncpa [#allocation21], 0
    %27 = vsyncpa [#allocation24], 0
    %28 = vsyncpa [#allocation4], 0
    // Predicated region
    $region2: #{tpu_custom_call.1} parent=1 // pred_check
      _
    $region3: #{tpu_custom_call.1} parent=1 // pred_check_branch
      %30 = sbr.rel (0) target = $region5
    $region4: #{tpu_custom_call.1} parent=1 // pred_region
      %s32 = ssub.s32 32, 32
      %33 = vsyncadd [#allocation3], %s32
      %s35 = sshll.u32 [#allocation2], 4
      %s36 = int_to_ptr.vmem [resolvable:$true] %s35
      %38 = dma.hbm_to_vmem [thread:$0]  %s0, 32, %s36, [#allocation3]
    $region5: #{tpu_custom_call.1} parent=1 // pred_fallthru
      _
    // Predicated region
    $region6: #{tpu_custom_call.1} parent=1 // pred_check
      _
    $region7: #{tpu_custom_call.1} parent=1 // pred_check_branch
      %40 = sbr.rel (0) target = $region9
    $region8: #{tpu_custom_call.1} parent=1 // pred_region
      %s42 = ssub.s32 512, 512
      %43 = vsyncadd [#allocation6], %s42
      %s44 = sshll.u32 [#allocation5], 4
      %s45 = int_to_ptr.vmem [resolvable:$true] %s44
      %50 = dma.hbm_to_vmem [thread:$0]  %s1, 512, %s45, [#allocation6], 128, 128, 8
    $region9: #{tpu_custom_call.1} parent=1 // pred_fallthru
      _
    // Predicated region
    $region10: #{tpu_custom_call.1} parent=1 // pred_check
      _
    $region11: #{tpu_custom_call.1} parent=1 // pred_check_branch
      %52 = sbr.rel (0) target = $region13
    $region12: #{tpu_custom_call.1} parent=1 // pred_region
      %s54 = ssub.s32 16, 16
      %55 = vsyncadd [#allocation6], %s54
      %s57 = sshll.u32 [#allocation7], 4
      %s58 = int_to_ptr.vmem [resolvable:$true] %s57
      %60 = dma.hbm_to_vmem [thread:$0]  %s2, 16, %s58, [#allocation6]
    $region13: #{tpu_custom_call.1} parent=1 // pred_fallthru
      _
    // Predicated region
    $region14: #{tpu_custom_call.1} parent=1 // pred_check
      _
    $region15: #{tpu_custom_call.1} parent=1 // pred_check_branch
      %62 = sbr.rel (0) target = $region17
    $region16: #{tpu_custom_call.1} parent=1 // pred_region
      %s64 = ssub.s32 512, 512
      %65 = vsyncadd [#allocation9], %s64
      %s66 = sshll.u32 [#allocation8], 4
      %s67 = int_to_ptr.vmem [resolvable:$true] %s66
      %72 = dma.hbm_to_vmem [thread:$0]  %s3, 512, %s67, [#allocation9], 128, 128, 8
    $region17: #{tpu_custom_call.1} parent=1 // pred_fallthru
      _
    // Predicated region
    $region18: #{tpu_custom_call.1} parent=1 // pred_check
      _
    $region19: #{tpu_custom_call.1} parent=1 // pred_check_branch
      %74 = sbr.rel (0) target = $region21
    $region20: #{tpu_custom_call.1} parent=1 // pred_region
      %s76 = ssub.s32 16, 16
      %77 = vsyncadd [#allocation9], %s76
      %s79 = sshll.u32 [#allocation10], 4
      %s80 = int_to_ptr.vmem [resolvable:$true] %s79
      %82 = dma.hbm_to_vmem [thread:$0]  %s4, 16, %s80, [#allocation9]
    $region21: #{tpu_custom_call.1} parent=1 // pred_fallthru
      _
    // Predicated region
    $region22: #{tpu_custom_call.1} parent=1 // pred_check
      _
    $region23: #{tpu_custom_call.1} parent=1 // pred_check_branch
      %84 = sbr.rel (0) target = $region25
    $region24: #{tpu_custom_call.1} parent=1 // pred_region
      %s86 = ssub.s32 512, 512
      %87 = vsyncadd [#allocation12], %s86
      %s88 = sshll.u32 [#allocation11], 4
      %s89 = int_to_ptr.vmem [resolvable:$true] %s88
      %94 = dma.hbm_to_vmem [thread:$0]  %s5, 512, %s89, [#allocation12], 128, 128, 8
    $region25: #{tpu_custom_call.1} parent=1 // pred_fallthru
      _
    // Predicated region
    $region26: #{tpu_custom_call.1} parent=1 // pred_check
      _
    $region27: #{tpu_custom_call.1} parent=1 // pred_check_branch
      %96 = sbr.rel (0) target = $region29
    $region28: #{tpu_custom_call.1} parent=1 // pred_region
      %s98 = ssub.s32 16, 16
      %99 = vsyncadd [#allocation12], %s98
      %s101 = sshll.u32 [#allocation13], 4
      %s102 = int_to_ptr.vmem [resolvable:$true] %s101
      %104 = dma.hbm_to_vmem [thread:$0]  %s6, 16, %s102, [#allocation12]
    $region29: #{tpu_custom_call.1} parent=1 // pred_fallthru
      _
    // Predicated region
    $region30: #{tpu_custom_call.1} parent=1 // pred_check
      _
    $region31: #{tpu_custom_call.1} parent=1 // pred_check_branch
      %106 = sbr.rel (0) target = $region33
    $region32: #{tpu_custom_call.1} parent=1 // pred_region
      %s108 = ssub.s32 512, 512
      %109 = vsyncadd [#allocation15], %s108
      %s110 = sshll.u32 [#allocation14], 4
      %s111 = int_to_ptr.vmem [resolvable:$true] %s110
      %116 = dma.hbm_to_vmem [thread:$0]  %s7, 512, %s111, [#allocation15], 128, 128, 8
    $region33: #{tpu_custom_call.1} parent=1 // pred_fallthru
      _
    // Predicated region
    $region34: #{tpu_custom_call.1} parent=1 // pred_check
      _
    $region35: #{tpu_custom_call.1} parent=1 // pred_check_branch
      %118 = sbr.rel (0) target = $region37
    $region36: #{tpu_custom_call.1} parent=1 // pred_region
      %s120 = ssub.s32 16, 16
      %121 = vsyncadd [#allocation15], %s120
      %s123 = sshll.u32 [#allocation16], 4
      %s124 = int_to_ptr.vmem [resolvable:$true] %s123
      %126 = dma.hbm_to_vmem [thread:$0]  %s8, 16, %s124, [#allocation15]
    $region37: #{tpu_custom_call.1} parent=1 // pred_fallthru
      _
    // Predicated region
    $region38: #{tpu_custom_call.1} parent=1 // pred_check
      _
    $region39: #{tpu_custom_call.1} parent=1 // pred_check_branch
      %128 = sbr.rel (0) target = $region41
    $region40: #{tpu_custom_call.1} parent=1 // pred_region
      %s130 = ssub.s32 4096, 4096
      %131 = vsyncadd [#allocation18], %s130
      %s132 = sshll.u32 [#allocation17], 4
      %s133 = int_to_ptr.vmem [resolvable:$true] %s132
      %138 = dma.hbm_to_vmem [thread:$0]  %s9, 4096, %s133, [#allocation18], 256, 256, 16
    $region41: #{tpu_custom_call.1} parent=1 // pred_fallthru
      _
    // Predicated region
    $region42: #{tpu_custom_call.1} parent=1 // pred_check
      _
    $region43: #{tpu_custom_call.1} parent=1 // pred_check_branch
      %140 = sbr.rel (0) target = $region45
    $region44: #{tpu_custom_call.1} parent=1 // pred_region
      %s142 = ssub.s32 32, 32
      %143 = vsyncadd [#allocation18], %s142
      %s145 = sshll.u32 [#allocation19], 4
      %s146 = int_to_ptr.vmem [resolvable:$true] %s145
      %148 = dma.hbm_to_vmem [thread:$0]  %s10, 32, %s146, [#allocation18]
    $region45: #{tpu_custom_call.1} parent=1 // pred_fallthru
      _
    // Predicated region
    $region46: #{tpu_custom_call.1} parent=1 // pred_check
      _
    $region47: #{tpu_custom_call.1} parent=1 // pred_check_branch
      %150 = sbr.rel (0) target = $region49
    $region48: #{tpu_custom_call.1} parent=1 // pred_region
      %s152 = ssub.s32 16384, 16384
      %153 = vsyncadd [#allocation21], %s152
      %s154 = sshll.u32 [#allocation20], 4
      %s155 = int_to_ptr.vmem [resolvable:$true] %s154
      %160 = dma.hbm_to_vmem [thread:$0]  %s11, 16384, %s155, [#allocation21], 512, 512, 32
    $region49: #{tpu_custom_call.1} parent=1 // pred_fallthru
      _
    // Predicated region
    $region50: #{tpu_custom_call.1} parent=1 // pred_check
      _
    $region51: #{tpu_custom_call.1} parent=1 // pred_check_branch
      %162 = sbr.rel (0) target = $region53
    $region52: #{tpu_custom_call.1} parent=1 // pred_region
      %s164 = ssub.s32 64, 64
      %165 = vsyncadd [#allocation21], %s164
      %s167 = sshll.u32 [#allocation22], 4
      %s168 = int_to_ptr.vmem [resolvable:$true] %s167
      %170 = dma.hbm_to_vmem [thread:$0]  %s12, 64, %s168, [#allocation21]
    $region53: #{tpu_custom_call.1} parent=1 // pred_fallthru
      _
    // Predicated region
    $region54: #{tpu_custom_call.1} parent=1 // pred_check
      _
    $region55: #{tpu_custom_call.1} parent=1 // pred_check_branch
      %172 = sbr.rel (0) target = $region57
    $region56: #{tpu_custom_call.1} parent=1 // pred_region
      %s174 = ssub.s32 65536, 65536
      %175 = vsyncadd [#allocation24], %s174
      %s176 = sshll.u32 [#allocation23], 4
      %s177 = int_to_ptr.vmem [resolvable:$true] %s176
      %182 = dma.hbm_to_vmem [thread:$0]  %s13, 65536, %s177, [#allocation24], 1024, 1024, 64
    $region57: #{tpu_custom_call.1} parent=1 // pred_fallthru
      _
    // Predicated region
    $region58: #{tpu_custom_call.1} parent=1 // pred_check
      _
    $region59: #{tpu_custom_call.1} parent=1 // pred_check_branch
      %184 = sbr.rel (0) target = $region61
    $region60: #{tpu_custom_call.1} parent=1 // pred_region
      %s186 = ssub.s32 128, 128
      %187 = vsyncadd [#allocation24], %s186
      %s189 = sshll.u32 [#allocation25], 4
      %s190 = int_to_ptr.vmem [resolvable:$true] %s189
      %192 = dma.hbm_to_vmem [thread:$0]  %s14, 128, %s190, [#allocation24]
    $region61: #{tpu_custom_call.1} parent=1 // pred_fallthru
      _
    // Predicated region
    $region62: #{tpu_custom_call.1} parent=1 // pred_check
      _
    $region63: #{tpu_custom_call.1} parent=1 // pred_check_branch
      %194 = sbr.rel (0) target = $region65
    $region64: #{tpu_custom_call.1} parent=1 // pred_region
      %195 = dma.done [#allocation3], 32
    $region65: #{tpu_custom_call.1} parent=1 // pred_fallthru
      _
    // Predicated region
    $region66: #{tpu_custom_call.1} parent=1 // pred_check
      _
    $region67: #{tpu_custom_call.1} parent=1 // pred_check_branch
      %197 = sbr.rel (0) target = $region69
    $region68: #{tpu_custom_call.1} parent=1 // pred_region
      %198 = dma.done [#allocation6], 512
    $region69: #{tpu_custom_call.1} parent=1 // pred_fallthru
      _
    // Predicated region
    $region70: #{tpu_custom_call.1} parent=1 // pred_check
      _
    $region71: #{tpu_custom_call.1} parent=1 // pred_check_branch
      %200 = sbr.rel (0) target = $region73
    $region72: #{tpu_custom_call.1} parent=1 // pred_region
      %201 = dma.done [#allocation6], 16
    $region73: #{tpu_custom_call.1} parent=1 // pred_fallthru
      _
    // Predicated region
    $region74: #{tpu_custom_call.1} parent=1 // pred_check
      _
    $region75: #{tpu_custom_call.1} parent=1 // pred_check_branch
      %203 = sbr.rel (0) target = $region77
    $region76: #{tpu_custom_call.1} parent=1 // pred_region
      %204 = dma.done [#allocation9], 512
    $region77: #{tpu_custom_call.1} parent=1 // pred_fallthru
      _
    // Predicated region
    $region78: #{tpu_custom_call.1} parent=1 // pred_check
      _
    $region79: #{tpu_custom_call.1} parent=1 // pred_check_branch
      %206 = sbr.rel (0) target = $region81
    $region80: #{tpu_custom_call.1} parent=1 // pred_region
      %207 = dma.done [#allocation9], 16
    $region81: #{tpu_custom_call.1} parent=1 // pred_fallthru
      _
    // Predicated region
    $region82: #{tpu_custom_call.1} parent=1 // pred_check
      _
    $region83: #{tpu_custom_call.1} parent=1 // pred_check_branch
      %209 = sbr.rel (0) target = $region85
    $region84: #{tpu_custom_call.1} parent=1 // pred_region
      %210 = dma.done [#allocation12], 512
    $region85: #{tpu_custom_call.1} parent=1 // pred_fallthru
      _
    // Predicated region
    $region86: #{tpu_custom_call.1} parent=1 // pred_check
      _
    $region87: #{tpu_custom_call.1} parent=1 // pred_check_branch
      %212 = sbr.rel (0) target = $region89
    $region88: #{tpu_custom_call.1} parent=1 // pred_region
      %213 = dma.done [#allocation12], 16
    $region89: #{tpu_custom_call.1} parent=1 // pred_fallthru
      _
    // Predicated region
    $region90: #{tpu_custom_call.1} parent=1 // pred_check
      _
    $region91: #{tpu_custom_call.1} parent=1 // pred_check_branch
      %215 = sbr.rel (0) target = $region93
    $region92: #{tpu_custom_call.1} parent=1 // pred_region
      %216 = dma.done [#allocation15], 512
    $region93: #{tpu_custom_call.1} parent=1 // pred_fallthru
      _
    // Predicated region
    $region94: #{tpu_custom_call.1} parent=1 // pred_check
      _
    $region95: #{tpu_custom_call.1} parent=1 // pred_check_branch
      %218 = sbr.rel (0) target = $region97
    $region96: #{tpu_custom_call.1} parent=1 // pred_region
      %219 = dma.done [#allocation15], 16
    $region97: #{tpu_custom_call.1} parent=1 // pred_fallthru
      _
    // Predicated region
    $region98: #{tpu_custom_call.1} parent=1 // pred_check
      _
    $region99: #{tpu_custom_call.1} parent=1 // pred_check_branch
      %221 = sbr.rel (0) target = $region101
    $region100: #{tpu_custom_call.1} parent=1 // pred_region
      %222 = dma.done [#allocation18], 4096
    $region101: #{tpu_custom_call.1} parent=1 // pred_fallthru
      _
    // Predicated region
    $region102: #{tpu_custom_call.1} parent=1 // pred_check
      _
    $region103: #{tpu_custom_call.1} parent=1 // pred_check_branch
      %224 = sbr.rel (0) target = $region105
    $region104: #{tpu_custom_call.1} parent=1 // pred_region
      %225 = dma.done [#allocation18], 32
    $region105: #{tpu_custom_call.1} parent=1 // pred_fallthru
      _
    // Predicated region
    $region106: #{tpu_custom_call.1} parent=1 // pred_check
      _
    $region107: #{tpu_custom_call.1} parent=1 // pred_check_branch
      %227 = sbr.rel (0) target = $region109
    $region108: #{tpu_custom_call.1} parent=1 // pred_region
      %228 = dma.done [#allocation21], 16384
    $region109: #{tpu_custom_call.1} parent=1 // pred_fallthru
      _
    // Predicated region
    $region110: #{tpu_custom_call.1} parent=1 // pred_check
      _
    $region111: #{tpu_custom_call.1} parent=1 // pred_check_branch
      %230 = sbr.rel (0) target = $region113
    $region112: #{tpu_custom_call.1} parent=1 // pred_region
      %231 = dma.done [#allocation21], 64
    $region113: #{tpu_custom_call.1} parent=1 // pred_fallthru
      _
    // Predicated region
    $region114: #{tpu_custom_call.1} parent=1 // pred_check
      _
    $region115: #{tpu_custom_call.1} parent=1 // pred_check_branch
      %233 = sbr.rel (0) target = $region117
    $region116: #{tpu_custom_call.1} parent=1 // pred_region
      %234 = dma.done [#allocation24], 65536
    $region117: #{tpu_custom_call.1} parent=1 // pred_fallthru
      _
    // Predicated region
    $region118: #{tpu_custom_call.1} parent=1 // pred_check
      _
    $region119: #{tpu_custom_call.1} parent=1 // pred_check_branch
      %236 = sbr.rel (0) target = $region121
    $region120: #{tpu_custom_call.1} parent=1 // pred_region
      %237 = dma.done [#allocation24], 128
    $region121: #{tpu_custom_call.1} parent=1 // pred_fallthru
      _
    %v238 = vld [vmem:[#allocation2] sm:$0x3]
    %v239 = vld [vmem:[#allocation5] sm:$0xff]
    %v240 = vld [vmem:[#allocation5 + $0x8] sm:$0xff]
    %v241 = vld [vmem:[#allocation5 + $0x10] sm:$0xff]
    %v242 = vld [vmem:[#allocation5 + $0x18] sm:$0xff]
    %v243 = vld [vmem:[#allocation7] sm:$0x1]
    %v245 = vlaneseq
    %v246 = vshrl.u32 %v245, 7
    %v247 = vsub.s32 0, %v246
    %v248 = vrot.slane %v243, %v247
    %vm250 = vcmask 261120
    %v252 = vsel %vm250, %v238, 0
    %254 = vmatprep.subr.mxu0 0.0
    %255 = vmatpush1.msra.mxu0 0.0
    %256 = vmatprep.subr.mxu0 0.0
    %257 = vmatpush1.msra.mxu0 0.0
    %258 = vmatprep.subr.mxu0 0.0
    %259 = vmatpush1.msra.mxu0 0.0
    %260 = vmatprep.subr.mxu0 0.0
    %261 = vmatpush1.msra.mxu0 0.0
    %262 = vmatprep.subr.mxu0 0.0
    %263 = vmatpush1.msra.mxu0 0.0
    %264 = vmatprep.subr.mxu0 0.0
    %265 = vmatpush1.msra.mxu0 0.0
    %266 = vmatprep.subr.mxu0 0.0
    %267 = vmatpush1.msra.mxu0 0.0
    %268 = vmatprep.subr.mxu0 0.0
    %269 = vmatpush1.msra.mxu0 0.0
    %270 = vmatprep.subr.mxu0 0.0
    %271 = vmatpush1.msra.mxu0 0.0
    %272 = vmatprep.subr.mxu0 0.0
    %273 = vmatpush1.msra.mxu0 0.0
    %274 = vmatprep.subr.mxu0 0.0
    %275 = vmatpush1.msra.mxu0 0.0
    %276 = vmatprep.subr.mxu0 0.0
    %277 = vmatpush1.msra.mxu0 0.0
    %278 = vmatprep.subr.mxu0 0.0
    %279 = vmatpush1.msra.mxu0 %v242
    %280 = vmatprep.subr.mxu0 0.0
    %281 = vmatpush1.msra.mxu0 %v241
    %282 = vmatprep.subr.mxu0 0.0
    %283 = vmatpush1.msra.mxu0 %v240
    %284 = vmatprep.subr.mxu0 0.0
    %285 = vmatpush1.msra.mxu0 %v239
    %286 = vmatprep.subr.mxu0 0.0
    %287 = vmatpush2.msra.mxu0 0.0
    %288 = vmatprep.subr.mxu0 0.0
    %289 = vmatpush2.msra.mxu0 0.0
    %290 = vmatprep.subr.mxu0 0.0
    %291 = vmatpush2.msra.mxu0 0.0
    %292 = vmatprep.subr.mxu0 0.0
    %293 = vmatpush2.msra.mxu0 0.0
    %294 = vmatprep.subr.mxu0 0.0
    %295 = vmatpush2.msra.mxu0 0.0
    %296 = vmatprep.subr.mxu0 0.0
    %297 = vmatpush2.msra.mxu0 0.0
    %298 = vmatprep.subr.mxu0 0.0
    %299 = vmatpush2.msra.mxu0 0.0
    %300 = vmatprep.subr.mxu0 0.0
    %301 = vmatpush2.msra.mxu0 0.0
    %302 = vmatprep.subr.mxu0 0.0
    %303 = vmatpush2.msra.mxu0 0.0
    %304 = vmatprep.subr.mxu0 0.0
    %305 = vmatpush2.msra.mxu0 0.0
    %306 = vmatprep.subr.mxu0 0.0
    %307 = vmatpush2.msra.mxu0 0.0
    %308 = vmatprep.subr.mxu0 0.0
    %309 = vmatpush2.msra.mxu0 0.0
    %310 = vmatprep.subr.mxu0 0.0
    %311 = vmatpush2.msra.mxu0 0.0
    %312 = vmatprep.subr.mxu0 0.0
    %313 = vmatpush2.msra.mxu0 0.0
    %314 = vmatprep.subr.mxu0 0.0
    %315 = vmatpush2.msra.mxu0 0.0
    %316 = vmatprep.subr.mxu0 0.0
    %317 = vmatpush2.msra.mxu0 0.0
    %318 = vmatprep.mubr.f32.mxu0 0.0
    %319 = vmatmul.mubr.f32.gmra.mxu0 %v252
    %v320 = vpop.f32.mrf.mxu0
    %v321 = vadd.f32 %v248, %v320
    %v322 = vpop.f32.mrf.mxu0
    %323 = vdwg.mxu0
    %vm324 = vcmp.gt.f32.partialorder %v321, 0.0
    %v325 = vmul.f32 %v321, 0.2
    %v326 = vsel %vm324, %v321, %v325
    %v327 = vld [vmem:[#allocation8] sm:$0xff]
    %v328 = vld [vmem:[#allocation8 + $0x8] sm:$0xff]
    %v329 = vld [vmem:[#allocation8 + $0x10] sm:$0xff]
    %v330 = vld [vmem:[#allocation8 + $0x18] sm:$0xff]
    %v331 = vld [vmem:[#allocation10] sm:$0x1]
    %v333 = vlaneseq
    %v334 = vshrl.u32 %v333, 7
    %v335 = vsub.s32 0, %v334
    %v336 = vrot.slane %v331, %v335
    %v339 = vsel %vm250, %v326, 0
    %341 = vmatprep.subr.mxu0 0.0
    %342 = vmatpush1.msra.mxu0 0.0
    %343 = vmatprep.subr.mxu0 0.0
    %344 = vmatpush1.msra.mxu0 0.0
    %345 = vmatprep.subr.mxu0 0.0
    %346 = vmatpush1.msra.mxu0 0.0
    %347 = vmatprep.subr.mxu0 0.0
    %348 = vmatpush1.msra.mxu0 0.0
    %349 = vmatprep.subr.mxu0 0.0
    %350 = vmatpush1.msra.mxu0 0.0
    %351 = vmatprep.subr.mxu0 0.0
    %352 = vmatpush1.msra.mxu0 0.0
    %353 = vmatprep.subr.mxu0 0.0
    %354 = vmatpush1.msra.mxu0 0.0
    %355 = vmatprep.subr.mxu0 0.0
    %356 = vmatpush1.msra.mxu0 0.0
    %357 = vmatprep.subr.mxu0 0.0
    %358 = vmatpush1.msra.mxu0 0.0
    %359 = vmatprep.subr.mxu0 0.0
    %360 = vmatpush1.msra.mxu0 0.0
    %361 = vmatprep.subr.mxu0 0.0
    %362 = vmatpush1.msra.mxu0 0.0
    %363 = vmatprep.subr.mxu0 0.0
    %364 = vmatpush1.msra.mxu0 0.0
    %365 = vmatprep.subr.mxu0 0.0
    %366 = vmatpush1.msra.mxu0 %v330
    %367 = vmatprep.subr.mxu0 0.0
    %368 = vmatpush1.msra.mxu0 %v329
    %369 = vmatprep.subr.mxu0 0.0
    %370 = vmatpush1.msra.mxu0 %v328
    %371 = vmatprep.subr.mxu0 0.0
    %372 = vmatpush1.msra.mxu0 %v327
    %373 = vmatprep.subr.mxu0 0.0
    %374 = vmatpush2.msra.mxu0 0.0
    %375 = vmatprep.subr.mxu0 0.0
    %376 = vmatpush2.msra.mxu0 0.0
    %377 = vmatprep.subr.mxu0 0.0
    %378 = vmatpush2.msra.mxu0 0.0
    %379 = vmatprep.subr.mxu0 0.0
    %380 = vmatpush2.msra.mxu0 0.0
    %381 = vmatprep.subr.mxu0 0.0
    %382 = vmatpush2.msra.mxu0 0.0
    %383 = vmatprep.subr.mxu0 0.0
    %384 = vmatpush2.msra.mxu0 0.0
    %385 = vmatprep.subr.mxu0 0.0
    %386 = vmatpush2.msra.mxu0 0.0
    %387 = vmatprep.subr.mxu0 0.0
    %388 = vmatpush2.msra.mxu0 0.0
    %389 = vmatprep.subr.mxu0 0.0
    %390 = vmatpush2.msra.mxu0 0.0
    %391 = vmatprep.subr.mxu0 0.0
    %392 = vmatpush2.msra.mxu0 0.0
    %393 = vmatprep.subr.mxu0 0.0
    %394 = vmatpush2.msra.mxu0 0.0
    %395 = vmatprep.subr.mxu0 0.0
    %396 = vmatpush2.msra.mxu0 0.0
    %397 = vmatprep.subr.mxu0 0.0
    %398 = vmatpush2.msra.mxu0 0.0
    %399 = vmatprep.subr.mxu0 0.0
    %400 = vmatpush2.msra.mxu0 0.0
    %401 = vmatprep.subr.mxu0 0.0
    %402 = vmatpush2.msra.mxu0 0.0
    %403 = vmatprep.subr.mxu0 0.0
    %404 = vmatpush2.msra.mxu0 0.0
    %405 = vmatprep.mubr.f32.mxu0 0.0
    %406 = vmatmul.mubr.f32.gmra.mxu0 %v339
    %v407 = vpop.f32.mrf.mxu0
    %v408 = vadd.f32 %v336, %v407
    %v409 = vpop.f32.mrf.mxu0
    %410 = vdwg.mxu0
    %vm411 = vcmp.gt.f32.partialorder %v408, 0.0
    %v412 = vmul.f32 %v408, 0.2
    %v413 = vsel %vm411, %v408, %v412
    %v414 = vld [vmem:[#allocation11] sm:$0xff]
    %v415 = vld [vmem:[#allocation11 + $0x8] sm:$0xff]
    %v416 = vld [vmem:[#allocation11 + $0x10] sm:$0xff]
    %v417 = vld [vmem:[#allocation11 + $0x18] sm:$0xff]
    %v418 = vld [vmem:[#allocation13] sm:$0x1]
    %v420 = vlaneseq
    %v421 = vshrl.u32 %v420, 7
    %v422 = vsub.s32 0, %v421
    %v423 = vrot.slane %v418, %v422
    %v426 = vsel %vm250, %v413, 0
    %428 = vmatprep.subr.mxu0 0.0
    %429 = vmatpush1.msra.mxu0 0.0
    %430 = vmatprep.subr.mxu0 0.0
    %431 = vmatpush1.msra.mxu0 0.0
    %432 = vmatprep.subr.mxu0 0.0
    %433 = vmatpush1.msra.mxu0 0.0
    %434 = vmatprep.subr.mxu0 0.0
    %435 = vmatpush1.msra.mxu0 0.0
    %436 = vmatprep.subr.mxu0 0.0
    %437 = vmatpush1.msra.mxu0 0.0
    %438 = vmatprep.subr.mxu0 0.0
    %439 = vmatpush1.msra.mxu0 0.0
    %440 = vmatprep.subr.mxu0 0.0
    %441 = vmatpush1.msra.mxu0 0.0
    %442 = vmatprep.subr.mxu0 0.0
    %443 = vmatpush1.msra.mxu0 0.0
    %444 = vmatprep.subr.mxu0 0.0
    %445 = vmatpush1.msra.mxu0 0.0
    %446 = vmatprep.subr.mxu0 0.0
    %447 = vmatpush1.msra.mxu0 0.0
    %448 = vmatprep.subr.mxu0 0.0
    %449 = vmatpush1.msra.mxu0 0.0
    %450 = vmatprep.subr.mxu0 0.0
    %451 = vmatpush1.msra.mxu0 0.0
    %452 = vmatprep.subr.mxu0 0.0
    %453 = vmatpush1.msra.mxu0 %v417
    %454 = vmatprep.subr.mxu0 0.0
    %455 = vmatpush1.msra.mxu0 %v416
    %456 = vmatprep.subr.mxu0 0.0
    %457 = vmatpush1.msra.mxu0 %v415
    %458 = vmatprep.subr.mxu0 0.0
    %459 = vmatpush1.msra.mxu0 %v414
    %460 = vmatprep.subr.mxu0 0.0
    %461 = vmatpush2.msra.mxu0 0.0
    %462 = vmatprep.subr.mxu0 0.0
    %463 = vmatpush2.msra.mxu0 0.0
    %464 = vmatprep.subr.mxu0 0.0
    %465 = vmatpush2.msra.mxu0 0.0
    %466 = vmatprep.subr.mxu0 0.0
    %467 = vmatpush2.msra.mxu0 0.0
    %468 = vmatprep.subr.mxu0 0.0
    %469 = vmatpush2.msra.mxu0 0.0
    %470 = vmatprep.subr.mxu0 0.0
    %471 = vmatpush2.msra.mxu0 0.0
    %472 = vmatprep.subr.mxu0 0.0
    %473 = vmatpush2.msra.mxu0 0.0
    %474 = vmatprep.subr.mxu0 0.0
    %475 = vmatpush2.msra.mxu0 0.0
    %476 = vmatprep.subr.mxu0 0.0
    %477 = vmatpush2.msra.mxu0 0.0
    %478 = vmatprep.subr.mxu0 0.0
    %479 = vmatpush2.msra.mxu0 0.0
    %480 = vmatprep.subr.mxu0 0.0
    %481 = vmatpush2.msra.mxu0 0.0
    %482 = vmatprep.subr.mxu0 0.0
    %483 = vmatpush2.msra.mxu0 0.0
    %484 = vmatprep.subr.mxu0 0.0
    %485 = vmatpush2.msra.mxu0 0.0
    %486 = vmatprep.subr.mxu0 0.0
    %487 = vmatpush2.msra.mxu0 0.0
    %488 = vmatprep.subr.mxu0 0.0
    %489 = vmatpush2.msra.mxu0 0.0
    %490 = vmatprep.subr.mxu0 0.0
    %491 = vmatpush2.msra.mxu0 0.0
    %492 = vmatprep.mubr.f32.mxu0 0.0
    %493 = vmatmul.mubr.f32.gmra.mxu0 %v426
    %v494 = vpop.f32.mrf.mxu0
    %v495 = vadd.f32 %v423, %v494
    %v496 = vpop.f32.mrf.mxu0
    %497 = vdwg.mxu0
    %vm498 = vcmp.gt.f32.partialorder %v495, 0.0
    %v499 = vmul.f32 %v495, 0.2
    %v500 = vsel %vm498, %v495, %v499
    %v501 = vld [vmem:[#allocation14] sm:$0xff]
    %v502 = vld [vmem:[#allocation14 + $0x8] sm:$0xff]
    %v503 = vld [vmem:[#allocation14 + $0x10] sm:$0xff]
    %v504 = vld [vmem:[#allocation14 + $0x18] sm:$0xff]
    %v505 = vld [vmem:[#allocation16] sm:$0x1]
    %v507 = vlaneseq
    %v508 = vshrl.u32 %v507, 7
    %v509 = vsub.s32 0, %v508
    %v510 = vrot.slane %v505, %v509
    %v513 = vsel %vm250, %v500, 0
    %515 = vmatprep.subr.mxu0 0.0
    %516 = vmatpush1.msra.mxu0 0.0
    %517 = vmatprep.subr.mxu0 0.0
    %518 = vmatpush1.msra.mxu0 0.0
    %519 = vmatprep.subr.mxu0 0.0
    %520 = vmatpush1.msra.mxu0 0.0
    %521 = vmatprep.subr.mxu0 0.0
    %522 = vmatpush1.msra.mxu0 0.0
    %523 = vmatprep.subr.mxu0 0.0
    %524 = vmatpush1.msra.mxu0 0.0
    %525 = vmatprep.subr.mxu0 0.0
    %526 = vmatpush1.msra.mxu0 0.0
    %527 = vmatprep.subr.mxu0 0.0
    %528 = vmatpush1.msra.mxu0 0.0
    %529 = vmatprep.subr.mxu0 0.0
    %530 = vmatpush1.msra.mxu0 0.0
    %531 = vmatprep.subr.mxu0 0.0
    %532 = vmatpush1.msra.mxu0 0.0
    %533 = vmatprep.subr.mxu0 0.0
    %534 = vmatpush1.msra.mxu0 0.0
    %535 = vmatprep.subr.mxu0 0.0
    %536 = vmatpush1.msra.mxu0 0.0
    %537 = vmatprep.subr.mxu0 0.0
    %538 = vmatpush1.msra.mxu0 0.0
    %539 = vmatprep.subr.mxu0 0.0
    %540 = vmatpush1.msra.mxu0 %v504
    %541 = vmatprep.subr.mxu0 0.0
    %542 = vmatpush1.msra.mxu0 %v503
    %543 = vmatprep.subr.mxu0 0.0
    %544 = vmatpush1.msra.mxu0 %v502
    %545 = vmatprep.subr.mxu0 0.0
    %546 = vmatpush1.msra.mxu0 %v501
    %547 = vmatprep.subr.mxu0 0.0
    %548 = vmatpush2.msra.mxu0 0.0
    %549 = vmatprep.subr.mxu0 0.0
    %550 = vmatpush2.msra.mxu0 0.0
    %551 = vmatprep.subr.mxu0 0.0
    %552 = vmatpush2.msra.mxu0 0.0
    %553 = vmatprep.subr.mxu0 0.0
    %554 = vmatpush2.msra.mxu0 0.0
    %555 = vmatprep.subr.mxu0 0.0
    %556 = vmatpush2.msra.mxu0 0.0
    %557 = vmatprep.subr.mxu0 0.0
    %558 = vmatpush2.msra.mxu0 0.0
    %559 = vmatprep.subr.mxu0 0.0
    %560 = vmatpush2.msra.mxu0 0.0
    %561 = vmatprep.subr.mxu0 0.0
    %562 = vmatpush2.msra.mxu0 0.0
    %563 = vmatprep.subr.mxu0 0.0
    %564 = vmatpush2.msra.mxu0 0.0
    %565 = vmatprep.subr.mxu0 0.0
    %566 = vmatpush2.msra.mxu0 0.0
    %567 = vmatprep.subr.mxu0 0.0
    %568 = vmatpush2.msra.mxu0 0.0
    %569 = vmatprep.subr.mxu0 0.0
    %570 = vmatpush2.msra.mxu0 0.0
    %571 = vmatprep.subr.mxu0 0.0
    %572 = vmatpush2.msra.mxu0 0.0
    %573 = vmatprep.subr.mxu0 0.0
    %574 = vmatpush2.msra.mxu0 0.0
    %575 = vmatprep.subr.mxu0 0.0
    %576 = vmatpush2.msra.mxu0 0.0
    %577 = vmatprep.subr.mxu0 0.0
    %578 = vmatpush2.msra.mxu0 0.0
    %579 = vmatprep.mubr.f32.mxu0 0.0
    %580 = vmatmul.mubr.f32.gmra.mxu0 %v513
    %v581 = vpop.f32.mrf.mxu0
    %v582 = vadd.f32 %v510, %v581
    %v583 = vpop.f32.mrf.mxu0
    %584 = vdwg.mxu0
    %v585 = vld [vmem:[#allocation17] sm:$0xff]
    %v586 = vld [vmem:[#allocation17 + $0x8] sm:$0xff]
    %v587 = vld [vmem:[#allocation17 + $0x10] sm:$0xff]
    %v588 = vld [vmem:[#allocation17 + $0x18] sm:$0xff]
    %v589 = vld [vmem:[#allocation17 + $0x20] sm:$0xff]
    %v590 = vld [vmem:[#allocation17 + $0x28] sm:$0xff]
    %v591 = vld [vmem:[#allocation17 + $0x30] sm:$0xff]
    %v592 = vld [vmem:[#allocation17 + $0x38] sm:$0xff]
    %v593 = vld [vmem:[#allocation17 + $0x40] sm:$0xff]
    %v594 = vld [vmem:[#allocation17 + $0x48] sm:$0xff]
    %v595 = vld [vmem:[#allocation17 + $0x50] sm:$0xff]
    %v596 = vld [vmem:[#allocation17 + $0x58] sm:$0xff]
    %v597 = vld [vmem:[#allocation17 + $0x60] sm:$0xff]
    %v598 = vld [vmem:[#allocation17 + $0x68] sm:$0xff]
    %v599 = vld [vmem:[#allocation17 + $0x70] sm:$0xff]
    %v600 = vld [vmem:[#allocation17 + $0x78] sm:$0xff]
    %v601 = vld [vmem:[#allocation17 + $0x80] sm:$0xff]
    %v602 = vld [vmem:[#allocation17 + $0x88] sm:$0xff]
    %v603 = vld [vmem:[#allocation17 + $0x90] sm:$0xff]
    %v604 = vld [vmem:[#allocation17 + $0x98] sm:$0xff]
    %v605 = vld [vmem:[#allocation17 + $0xa0] sm:$0xff]
    %v606 = vld [vmem:[#allocation17 + $0xa8] sm:$0xff]
    %v607 = vld [vmem:[#allocation17 + $0xb0] sm:$0xff]
    %v608 = vld [vmem:[#allocation17 + $0xb8] sm:$0xff]
    %v609 = vld [vmem:[#allocation17 + $0xc0] sm:$0xff]
    %v610 = vld [vmem:[#allocation17 + $0xc8] sm:$0xff]
    %v611 = vld [vmem:[#allocation17 + $0xd0] sm:$0xff]
    %v612 = vld [vmem:[#allocation17 + $0xd8] sm:$0xff]
    %v613 = vld [vmem:[#allocation17 + $0xe0] sm:$0xff]
    %v614 = vld [vmem:[#allocation17 + $0xe8] sm:$0xff]
    %v615 = vld [vmem:[#allocation17 + $0xf0] sm:$0xff]
    %v616 = vld [vmem:[#allocation17 + $0xf8] sm:$0xff]
    %v617 = vld [vmem:[#allocation19] sm:$0x3]
    %v619 = vlaneseq
    %v620 = vshrl.u32 %v619, 7
    %v621 = vsub.s32 0, %v620
    %v622 = vrot.slane %v617, %v621
    %v623 = vlaneseq
    %v624 = vshrl.u32 %v623, 7
    %v625 = vsub.s32 1, %v624
    %v626 = vrot.slane %v617, %v625
    %629 = vmatprep.subr.mxu0 %v616
    %630 = vmatpush1.msra.mxu0 %v615
    %631 = vmatprep.subr.mxu0 %v614
    %632 = vmatpush1.msra.mxu0 %v613
    %633 = vmatprep.subr.mxu0 %v612
    %634 = vmatpush1.msra.mxu0 %v611
    %635 = vmatprep.subr.mxu0 %v610
    %636 = vmatpush1.msra.mxu0 %v609
    %637 = vmatprep.subr.mxu0 %v608
    %638 = vmatpush1.msra.mxu0 %v607
    %639 = vmatprep.subr.mxu0 %v606
    %640 = vmatpush1.msra.mxu0 %v605
    %641 = vmatprep.subr.mxu0 %v604
    %642 = vmatpush1.msra.mxu0 %v603
    %643 = vmatprep.subr.mxu0 %v602
    %644 = vmatpush1.msra.mxu0 %v601
    %645 = vmatprep.subr.mxu0 %v600
    %646 = vmatpush1.msra.mxu0 %v599
    %647 = vmatprep.subr.mxu0 %v598
    %648 = vmatpush1.msra.mxu0 %v597
    %649 = vmatprep.subr.mxu0 %v596
    %650 = vmatpush1.msra.mxu0 %v595
    %651 = vmatprep.subr.mxu0 %v594
    %652 = vmatpush1.msra.mxu0 %v593
    %653 = vmatprep.subr.mxu0 %v592
    %654 = vmatpush1.msra.mxu0 %v591
    %655 = vmatprep.subr.mxu0 %v590
    %656 = vmatpush1.msra.mxu0 %v589
    %657 = vmatprep.subr.mxu0 %v588
    %658 = vmatpush1.msra.mxu0 %v587
    %659 = vmatprep.subr.mxu0 %v586
    %660 = vmatpush1.msra.mxu0 %v585
    %661 = vmatprep.subr.mxu0 0.0
    %662 = vmatpush2.msra.mxu0 0.0
    %663 = vmatprep.subr.mxu0 0.0
    %664 = vmatpush2.msra.mxu0 0.0
    %665 = vmatprep.subr.mxu0 0.0
    %666 = vmatpush2.msra.mxu0 0.0
    %667 = vmatprep.subr.mxu0 0.0
    %668 = vmatpush2.msra.mxu0 0.0
    %669 = vmatprep.subr.mxu0 0.0
    %670 = vmatpush2.msra.mxu0 0.0
    %671 = vmatprep.subr.mxu0 0.0
    %672 = vmatpush2.msra.mxu0 0.0
    %673 = vmatprep.subr.mxu0 0.0
    %674 = vmatpush2.msra.mxu0 0.0
    %675 = vmatprep.subr.mxu0 0.0
    %676 = vmatpush2.msra.mxu0 0.0
    %677 = vmatprep.subr.mxu0 0.0
    %678 = vmatpush2.msra.mxu0 0.0
    %679 = vmatprep.subr.mxu0 0.0
    %680 = vmatpush2.msra.mxu0 0.0
    %681 = vmatprep.subr.mxu0 0.0
    %682 = vmatpush2.msra.mxu0 0.0
    %683 = vmatprep.subr.mxu0 0.0
    %684 = vmatpush2.msra.mxu0 0.0
    %685 = vmatprep.subr.mxu0 0.0
    %686 = vmatpush2.msra.mxu0 0.0
    %687 = vmatprep.subr.mxu0 0.0
    %688 = vmatpush2.msra.mxu0 0.0
    %689 = vmatprep.subr.mxu0 0.0
    %690 = vmatpush2.msra.mxu0 0.0
    %691 = vmatprep.subr.mxu0 0.0
    %692 = vmatpush2.msra.mxu0 0.0
    %693 = vmatprep.mubr.f32.mxu0 0.0
    %694 = vmatmul.mubr.f32.gmra.mxu0 %v582
    %v695 = vpop.f32.mrf.mxu0
    %v696 = vadd.f32 %v622, %v695
    %v697 = vpop.f32.mrf.mxu0
    %v698 = vadd.f32 %v626, %v697
    %699 = vdwg.mxu0
    %vm700 = vcmp.gt.f32.partialorder %v696, 0.0
    %vm701 = vcmp.gt.f32.partialorder %v698, 0.0
    %v702 = vmul.f32 %v696, 0.2
    %v703 = vmul.f32 %v698, 0.2
    %v704 = vsel %vm700, %v696, %v702
    %v705 = vsel %vm701, %v698, %v703
    %v706 = vld [vmem:[#allocation20] sm:$0xff]
    %v707 = vld [vmem:[#allocation20 + $0x8] sm:$0xff]
    %v708 = vld [vmem:[#allocation20 + $0x10] sm:$0xff]
    %v709 = vld [vmem:[#allocation20 + $0x18] sm:$0xff]
    %v710 = vld [vmem:[#allocation20 + $0x20] sm:$0xff]
    %v711 = vld [vmem:[#allocation20 + $0x28] sm:$0xff]
    %v712 = vld [vmem:[#allocation20 + $0x30] sm:$0xff]
    %v713 = vld [vmem:[#allocation20 + $0x38] sm:$0xff]
    %v714 = vld [vmem:[#allocation20 + $0x40] sm:$0xff]
    %v715 = vld [vmem:[#allocation20 + $0x48] sm:$0xff]
    %v716 = vld [vmem:[#allocation20 + $0x50] sm:$0xff]
    %v717 = vld [vmem:[#allocation20 + $0x58] sm:$0xff]
    %v718 = vld [vmem:[#allocation20 + $0x60] sm:$0xff]
    %v719 = vld [vmem:[#allocation20 + $0x68] sm:$0xff]
    %v720 = vld [vmem:[#allocation20 + $0x70] sm:$0xff]
    %v721 = vld [vmem:[#allocation20 + $0x78] sm:$0xff]
    %v722 = vld [vmem:[#allocation20 + $0x80] sm:$0xff]
    %v723 = vld [vmem:[#allocation20 + $0x88] sm:$0xff]
    %v724 = vld [vmem:[#allocation20 + $0x90] sm:$0xff]
    %v725 = vld [vmem:[#allocation20 + $0x98] sm:$0xff]
    %v726 = vld [vmem:[#allocation20 + $0xa0] sm:$0xff]
    %v727 = vld [vmem:[#allocation20 + $0xa8] sm:$0xff]
    %v728 = vld [vmem:[#allocation20 + $0xb0] sm:$0xff]
    %v729 = vld [vmem:[#allocation20 + $0xb8] sm:$0xff]
    %v730 = vld [vmem:[#allocation20 + $0xc0] sm:$0xff]
    %v731 = vld [vmem:[#allocation20 + $0xc8] sm:$0xff]
    %v732 = vld [vmem:[#allocation20 + $0xd0] sm:$0xff]
    %v733 = vld [vmem:[#allocation20 + $0xd8] sm:$0xff]
    %v734 = vld [vmem:[#allocation20 + $0xe0] sm:$0xff]
    %v735 = vld [vmem:[#allocation20 + $0xe8] sm:$0xff]
    %v736 = vld [vmem:[#allocation20 + $0xf0] sm:$0xff]
    %v737 = vld [vmem:[#allocation20 + $0xf8] sm:$0xff]
    %v738 = vld [vmem:[#allocation20 + $0x100] sm:$0xff]
    %v739 = vld [vmem:[#allocation20 + $0x108] sm:$0xff]
    %v740 = vld [vmem:[#allocation20 + $0x110] sm:$0xff]
    %v741 = vld [vmem:[#allocation20 + $0x118] sm:$0xff]
    %v742 = vld [vmem:[#allocation20 + $0x120] sm:$0xff]
    %v743 = vld [vmem:[#allocation20 + $0x128] sm:$0xff]
    %v744 = vld [vmem:[#allocation20 + $0x130] sm:$0xff]
    %v745 = vld [vmem:[#allocation20 + $0x138] sm:$0xff]
    %v746 = vld [vmem:[#allocation20 + $0x140] sm:$0xff]
    %v747 = vld [vmem:[#allocation20 + $0x148] sm:$0xff]
    %v748 = vld [vmem:[#allocation20 + $0x150] sm:$0xff]
    %v749 = vld [vmem:[#allocation20 + $0x158] sm:$0xff]
    %v750 = vld [vmem:[#allocation20 + $0x160] sm:$0xff]
    %v751 = vld [vmem:[#allocation20 + $0x168] sm:$0xff]
    %v752 = vld [vmem:[#allocation20 + $0x170] sm:$0xff]
    %v753 = vld [vmem:[#allocation20 + $0x178] sm:$0xff]
    %v754 = vld [vmem:[#allocation20 + $0x180] sm:$0xff]
    %v755 = vld [vmem:[#allocation20 + $0x188] sm:$0xff]
    %v756 = vld [vmem:[#allocation20 + $0x190] sm:$0xff]
    %v757 = vld [vmem:[#allocation20 + $0x198] sm:$0xff]
    %v758 = vld [vmem:[#allocation20 + $0x1a0] sm:$0xff]
    %v759 = vld [vmem:[#allocation20 + $0x1a8] sm:$0xff]
    %v760 = vld [vmem:[#allocation20 + $0x1b0] sm:$0xff]
    %v761 = vld [vmem:[#allocation20 + $0x1b8] sm:$0xff]
    %v762 = vld [vmem:[#allocation20 + $0x1c0] sm:$0xff]
    %v763 = vld [vmem:[#allocation20 + $0x1c8] sm:$0xff]
    %v764 = vld [vmem:[#allocation20 + $0x1d0] sm:$0xff]
    %v765 = vld [vmem:[#allocation20 + $0x1d8] sm:$0xff]
    %v766 = vld [vmem:[#allocation20 + $0x1e0] sm:$0xff]
    %v767 = vld [vmem:[#allocation20 + $0x1e8] sm:$0xff]
    %v768 = vld [vmem:[#allocation20 + $0x1f0] sm:$0xff]
    %v769 = vld [vmem:[#allocation20 + $0x1f8] sm:$0xff]
    %v770 = vld [vmem:[#allocation20 + $0x200] sm:$0xff]
    %v771 = vld [vmem:[#allocation20 + $0x208] sm:$0xff]
    %v772 = vld [vmem:[#allocation20 + $0x210] sm:$0xff]
    %v773 = vld [vmem:[#allocation20 + $0x218] sm:$0xff]
    %v774 = vld [vmem:[#allocation20 + $0x220] sm:$0xff]
    %v775 = vld [vmem:[#allocation20 + $0x228] sm:$0xff]
    %v776 = vld [vmem:[#allocation20 + $0x230] sm:$0xff]
    %v777 = vld [vmem:[#allocation20 + $0x238] sm:$0xff]
    %v778 = vld [vmem:[#allocation20 + $0x240] sm:$0xff]
    %v779 = vld [vmem:[#allocation20 + $0x248] sm:$0xff]
    %v780 = vld [vmem:[#allocation20 + $0x250] sm:$0xff]
    %v781 = vld [vmem:[#allocation20 + $0x258] sm:$0xff]
    %v782 = vld [vmem:[#allocation20 + $0x260] sm:$0xff]
    %v783 = vld [vmem:[#allocation20 + $0x268] sm:$0xff]
    %v784 = vld [vmem:[#allocation20 + $0x270] sm:$0xff]
    %v785 = vld [vmem:[#allocation20 + $0x278] sm:$0xff]
    %v786 = vld [vmem:[#allocation20 + $0x280] sm:$0xff]
    %v787 = vld [vmem:[#allocation20 + $0x288] sm:$0xff]
    %v788 = vld [vmem:[#allocation20 + $0x290] sm:$0xff]
    %v789 = vld [vmem:[#allocation20 + $0x298] sm:$0xff]
    %v790 = vld [vmem:[#allocation20 + $0x2a0] sm:$0xff]
    %v791 = vld [vmem:[#allocation20 + $0x2a8] sm:$0xff]
    %v792 = vld [vmem:[#allocation20 + $0x2b0] sm:$0xff]
    %v793 = vld [vmem:[#allocation20 + $0x2b8] sm:$0xff]
    %v794 = vld [vmem:[#allocation20 + $0x2c0] sm:$0xff]
    %v795 = vld [vmem:[#allocation20 + $0x2c8] sm:$0xff]
    %v796 = vld [vmem:[#allocation20 + $0x2d0] sm:$0xff]
    %v797 = vld [vmem:[#allocation20 + $0x2d8] sm:$0xff]
    %v798 = vld [vmem:[#allocation20 + $0x2e0] sm:$0xff]
    %v799 = vld [vmem:[#allocation20 + $0x2e8] sm:$0xff]
    %v800 = vld [vmem:[#allocation20 + $0x2f0] sm:$0xff]
    %v801 = vld [vmem:[#allocation20 + $0x2f8] sm:$0xff]
    %v802 = vld [vmem:[#allocation20 + $0x300] sm:$0xff]
    %v803 = vld [vmem:[#allocation20 + $0x308] sm:$0xff]
    %v804 = vld [vmem:[#allocation20 + $0x310] sm:$0xff]
    %v805 = vld [vmem:[#allocation20 + $0x318] sm:$0xff]
    %v806 = vld [vmem:[#allocation20 + $0x320] sm:$0xff]
    %v807 = vld [vmem:[#allocation20 + $0x328] sm:$0xff]
    %v808 = vld [vmem:[#allocation20 + $0x330] sm:$0xff]
    %v809 = vld [vmem:[#allocation20 + $0x338] sm:$0xff]
    %v810 = vld [vmem:[#allocation20 + $0x340] sm:$0xff]
    %v811 = vld [vmem:[#allocation20 + $0x348] sm:$0xff]
    %v812 = vld [vmem:[#allocation20 + $0x350] sm:$0xff]
    %v813 = vld [vmem:[#allocation20 + $0x358] sm:$0xff]
    %v814 = vld [vmem:[#allocation20 + $0x360] sm:$0xff]
    %v815 = vld [vmem:[#allocation20 + $0x368] sm:$0xff]
    %v816 = vld [vmem:[#allocation20 + $0x370] sm:$0xff]
    %v817 = vld [vmem:[#allocation20 + $0x378] sm:$0xff]
    %v818 = vld [vmem:[#allocation20 + $0x380] sm:$0xff]
    %v819 = vld [vmem:[#allocation20 + $0x388] sm:$0xff]
    %v820 = vld [vmem:[#allocation20 + $0x390] sm:$0xff]
    %v821 = vld [vmem:[#allocation20 + $0x398] sm:$0xff]
    %v822 = vld [vmem:[#allocation20 + $0x3a0] sm:$0xff]
    %v823 = vld [vmem:[#allocation20 + $0x3a8] sm:$0xff]
    %v824 = vld [vmem:[#allocation20 + $0x3b0] sm:$0xff]
    %v825 = vld [vmem:[#allocation20 + $0x3b8] sm:$0xff]
    %v826 = vld [vmem:[#allocation20 + $0x3c0] sm:$0xff]
    %v827 = vld [vmem:[#allocation20 + $0x3c8] sm:$0xff]
    %v828 = vld [vmem:[#allocation20 + $0x3d0] sm:$0xff]
    %v829 = vld [vmem:[#allocation20 + $0x3d8] sm:$0xff]
    %v830 = vld [vmem:[#allocation20 + $0x3e0] sm:$0xff]
    %v831 = vld [vmem:[#allocation20 + $0x3e8] sm:$0xff]
    %v832 = vld [vmem:[#allocation20 + $0x3f0] sm:$0xff]
    %v833 = vld [vmem:[#allocation20 + $0x3f8] sm:$0xff]
    %v834 = vld [vmem:[#allocation22] sm:$0xf]
    %v836 = vlaneseq
    %v837 = vshrl.u32 %v836, 7
    %v838 = vsub.s32 0, %v837
    %v839 = vrot.slane %v834, %v838
    %v840 = vlaneseq
    %v841 = vshrl.u32 %v840, 7
    %v842 = vsub.s32 1, %v841
    %v843 = vrot.slane %v834, %v842
    %v844 = vlaneseq
    %v845 = vshrl.u32 %v844, 7
    %v846 = vsub.s32 2, %v845
    %v847 = vrot.slane %v834, %v846
    %v848 = vlaneseq
    %v849 = vshrl.u32 %v848, 7
    %v850 = vsub.s32 3, %v849
    %v851 = vrot.slane %v834, %v850
    %856 = vmatprep.subr.mxu0 %v767
    %857 = vmatpush1.msra.mxu0 %v766
    %858 = vmatprep.subr.mxu0 %v763
    %859 = vmatpush1.msra.mxu0 %v762
    %860 = vmatprep.subr.mxu0 %v759
    %861 = vmatpush1.msra.mxu0 %v758
    %862 = vmatprep.subr.mxu0 %v755
    %863 = vmatpush1.msra.mxu0 %v754
    %864 = vmatprep.subr.mxu0 %v751
    %865 = vmatpush1.msra.mxu0 %v750
    %866 = vmatprep.subr.mxu0 %v747
    %867 = vmatpush1.msra.mxu0 %v746
    %868 = vmatprep.subr.mxu0 %v743
    %869 = vmatpush1.msra.mxu0 %v742
    %870 = vmatprep.subr.mxu0 %v739
    %871 = vmatpush1.msra.mxu0 %v738
    %872 = vmatprep.subr.mxu0 %v735
    %873 = vmatpush1.msra.mxu0 %v734
    %874 = vmatprep.subr.mxu0 %v731
    %875 = vmatpush1.msra.mxu0 %v730
    %876 = vmatprep.subr.mxu0 %v727
    %877 = vmatpush1.msra.mxu0 %v726
    %878 = vmatprep.subr.mxu0 %v723
    %879 = vmatpush1.msra.mxu0 %v722
    %880 = vmatprep.subr.mxu0 %v719
    %881 = vmatpush1.msra.mxu0 %v718
    %882 = vmatprep.subr.mxu0 %v715
    %883 = vmatpush1.msra.mxu0 %v714
    %884 = vmatprep.subr.mxu0 %v711
    %885 = vmatpush1.msra.mxu0 %v710
    %886 = vmatprep.subr.mxu0 %v707
    %887 = vmatpush1.msra.mxu0 %v706
    %888 = vmatprep.subr.mxu0 %v831
    %889 = vmatpush2.msra.mxu0 %v830
    %890 = vmatprep.subr.mxu0 %v827
    %891 = vmatpush2.msra.mxu0 %v826
    %892 = vmatprep.subr.mxu0 %v823
    %893 = vmatpush2.msra.mxu0 %v822
    %894 = vmatprep.subr.mxu0 %v819
    %895 = vmatpush2.msra.mxu0 %v818
    %896 = vmatprep.subr.mxu0 %v815
    %897 = vmatpush2.msra.mxu0 %v814
    %898 = vmatprep.subr.mxu0 %v811
    %899 = vmatpush2.msra.mxu0 %v810
    %900 = vmatprep.subr.mxu0 %v807
    %901 = vmatpush2.msra.mxu0 %v806
    %902 = vmatprep.subr.mxu0 %v803
    %903 = vmatpush2.msra.mxu0 %v802
    %904 = vmatprep.subr.mxu0 %v799
    %905 = vmatpush2.msra.mxu0 %v798
    %906 = vmatprep.subr.mxu0 %v795
    %907 = vmatpush2.msra.mxu0 %v794
    %908 = vmatprep.subr.mxu0 %v791
    %909 = vmatpush2.msra.mxu0 %v790
    %910 = vmatprep.subr.mxu0 %v787
    %911 = vmatpush2.msra.mxu0 %v786
    %912 = vmatprep.subr.mxu0 %v783
    %913 = vmatpush2.msra.mxu0 %v782
    %914 = vmatprep.subr.mxu0 %v779
    %915 = vmatpush2.msra.mxu0 %v778
    %916 = vmatprep.subr.mxu0 %v775
    %917 = vmatpush2.msra.mxu0 %v774
    %918 = vmatprep.subr.mxu0 %v771
    %919 = vmatpush2.msra.mxu0 %v770
    %920 = vmatprep.mubr.f32.mxu0 %v705
    %921 = vmatmul.mubr.f32.gmra.mxu0 %v704
    %v922 = vpop.f32.mrf.mxu0
    %v923 = vadd.f32 %v839, %v922
    %v924 = vpop.f32.mrf.mxu0
    %v925 = vadd.f32 %v843, %v924
    %926 = vdwg.mxu0
    %927 = vmatprep.subr.mxu0 %v769
    %928 = vmatpush1.msra.mxu0 %v768
    %929 = vmatprep.subr.mxu0 %v765
    %930 = vmatpush1.msra.mxu0 %v764
    %931 = vmatprep.subr.mxu0 %v761
    %932 = vmatpush1.msra.mxu0 %v760
    %933 = vmatprep.subr.mxu0 %v757
    %934 = vmatpush1.msra.mxu0 %v756
    %935 = vmatprep.subr.mxu0 %v753
    %936 = vmatpush1.msra.mxu0 %v752
    %937 = vmatprep.subr.mxu0 %v749
    %938 = vmatpush1.msra.mxu0 %v748
    %939 = vmatprep.subr.mxu0 %v745
    %940 = vmatpush1.msra.mxu0 %v744
    %941 = vmatprep.subr.mxu0 %v741
    %942 = vmatpush1.msra.mxu0 %v740
    %943 = vmatprep.subr.mxu0 %v737
    %944 = vmatpush1.msra.mxu0 %v736
    %945 = vmatprep.subr.mxu0 %v733
    %946 = vmatpush1.msra.mxu0 %v732
    %947 = vmatprep.subr.mxu0 %v729
    %948 = vmatpush1.msra.mxu0 %v728
    %949 = vmatprep.subr.mxu0 %v725
    %950 = vmatpush1.msra.mxu0 %v724
    %951 = vmatprep.subr.mxu0 %v721
    %952 = vmatpush1.msra.mxu0 %v720
    %953 = vmatprep.subr.mxu0 %v717
    %954 = vmatpush1.msra.mxu0 %v716
    %955 = vmatprep.subr.mxu0 %v713
    %956 = vmatpush1.msra.mxu0 %v712
    %957 = vmatprep.subr.mxu0 %v709
    %958 = vmatpush1.msra.mxu0 %v708
    %959 = vmatprep.subr.mxu0 %v833
    %960 = vmatpush2.msra.mxu0 %v832
    %961 = vmatprep.subr.mxu0 %v829
    %962 = vmatpush2.msra.mxu0 %v828
    %963 = vmatprep.subr.mxu0 %v825
    %964 = vmatpush2.msra.mxu0 %v824
    %965 = vmatprep.subr.mxu0 %v821
    %966 = vmatpush2.msra.mxu0 %v820
    %967 = vmatprep.subr.mxu0 %v817
    %968 = vmatpush2.msra.mxu0 %v816
    %969 = vmatprep.subr.mxu0 %v813
    %970 = vmatpush2.msra.mxu0 %v812
    %971 = vmatprep.subr.mxu0 %v809
    %972 = vmatpush2.msra.mxu0 %v808
    %973 = vmatprep.subr.mxu0 %v805
    %974 = vmatpush2.msra.mxu0 %v804
    %975 = vmatprep.subr.mxu0 %v801
    %976 = vmatpush2.msra.mxu0 %v800
    %977 = vmatprep.subr.mxu0 %v797
    %978 = vmatpush2.msra.mxu0 %v796
    %979 = vmatprep.subr.mxu0 %v793
    %980 = vmatpush2.msra.mxu0 %v792
    %981 = vmatprep.subr.mxu0 %v789
    %982 = vmatpush2.msra.mxu0 %v788
    %983 = vmatprep.subr.mxu0 %v785
    %984 = vmatpush2.msra.mxu0 %v784
    %985 = vmatprep.subr.mxu0 %v781
    %986 = vmatpush2.msra.mxu0 %v780
    %987 = vmatprep.subr.mxu0 %v777
    %988 = vmatpush2.msra.mxu0 %v776
    %989 = vmatprep.subr.mxu0 %v773
    %990 = vmatpush2.msra.mxu0 %v772
    %991 = vmatprep.mubr.f32.mxu0 %v705
    %992 = vmatmul.mubr.f32.gmra.mxu0 %v704
    %v993 = vpop.f32.mrf.mxu0
    %v994 = vadd.f32 %v847, %v993
    %v995 = vpop.f32.mrf.mxu0
    %v996 = vadd.f32 %v851, %v995
    %997 = vdwg.mxu0
    %vm998 = vcmp.gt.f32.partialorder %v923, 0.0
    %vm999 = vcmp.gt.f32.partialorder %v925, 0.0
    %vm1000 = vcmp.gt.f32.partialorder %v994, 0.0
    %vm1001 = vcmp.gt.f32.partialorder %v996, 0.0
    %v1002 = vmul.f32 %v923, 0.2
    %v1003 = vmul.f32 %v925, 0.2
    %v1004 = vmul.f32 %v994, 0.2
    %v1005 = vmul.f32 %v996, 0.2
    %v1006 = vsel %vm998, %v923, %v1002
    %v1007 = vsel %vm999, %v925, %v1003
    %v1008 = vsel %vm1000, %v994, %v1004
    %v1009 = vsel %vm1001, %v996, %v1005
    %v1010 = vld [vmem:[#allocation23] sm:$0xff]
    %v1011 = vld [vmem:[#allocation23 + $0x8] sm:$0xff]
    %v1012 = vld [vmem:[#allocation23 + $0x10] sm:$0xff]
    %v1013 = vld [vmem:[#allocation23 + $0x18] sm:$0xff]
    %v1014 = vld [vmem:[#allocation23 + $0x20] sm:$0xff]
    %v1015 = vld [vmem:[#allocation23 + $0x28] sm:$0xff]
    %v1016 = vld [vmem:[#allocation23 + $0x30] sm:$0xff]
    %v1017 = vld [vmem:[#allocation23 + $0x38] sm:$0xff]
    %v1018 = vld [vmem:[#allocation23 + $0x40] sm:$0xff]
    %v1019 = vld [vmem:[#allocation23 + $0x48] sm:$0xff]
    %v1020 = vld [vmem:[#allocation23 + $0x50] sm:$0xff]
    %v1021 = vld [vmem:[#allocation23 + $0x58] sm:$0xff]
    %v1022 = vld [vmem:[#allocation23 + $0x60] sm:$0xff]
    %v1023 = vld [vmem:[#allocation23 + $0x68] sm:$0xff]
    %v1024 = vld [vmem:[#allocation23 + $0x70] sm:$0xff]
    %v1025 = vld [vmem:[#allocation23 + $0x78] sm:$0xff]
    %v1026 = vld [vmem:[#allocation23 + $0x80] sm:$0xff]
    %v1027 = vld [vmem:[#allocation23 + $0x88] sm:$0xff]
    %v1028 = vld [vmem:[#allocation23 + $0x90] sm:$0xff]
    %v1029 = vld [vmem:[#allocation23 + $0x98] sm:$0xff]
    %v1030 = vld [vmem:[#allocation23 + $0xa0] sm:$0xff]
    %v1031 = vld [vmem:[#allocation23 + $0xa8] sm:$0xff]
    %v1032 = vld [vmem:[#allocation23 + $0xb0] sm:$0xff]
    %v1033 = vld [vmem:[#allocation23 + $0xb8] sm:$0xff]
    %v1034 = vld [vmem:[#allocation23 + $0xc0] sm:$0xff]
    %v1035 = vld [vmem:[#allocation23 + $0xc8] sm:$0xff]
    %v1036 = vld [vmem:[#allocation23 + $0xd0] sm:$0xff]
    %v1037 = vld [vmem:[#allocation23 + $0xd8] sm:$0xff]
    %v1038 = vld [vmem:[#allocation23 + $0xe0] sm:$0xff]
    %v1039 = vld [vmem:[#allocation23 + $0xe8] sm:$0xff]
    %v1040 = vld [vmem:[#allocation23 + $0xf0] sm:$0xff]
    %v1041 = vld [vmem:[#allocation23 + $0xf8] sm:$0xff]
    %v1042 = vld [vmem:[#allocation23 + $0x100] sm:$0xff]
    %v1043 = vld [vmem:[#allocation23 + $0x108] sm:$0xff]
    %v1044 = vld [vmem:[#allocation23 + $0x110] sm:$0xff]
    %v1045 = vld [vmem:[#allocation23 + $0x118] sm:$0xff]
    %v1046 = vld [vmem:[#allocation23 + $0x120] sm:$0xff]
    %v1047 = vld [vmem:[#allocation23 + $0x128] sm:$0xff]
    %v1048 = vld [vmem:[#allocation23 + $0x130] sm:$0xff]
    %v1049 = vld [vmem:[#allocation23 + $0x138] sm:$0xff]
    %v1050 = vld [vmem:[#allocation23 + $0x140] sm:$0xff]
    %v1051 = vld [vmem:[#allocation23 + $0x148] sm:$0xff]
    %v1052 = vld [vmem:[#allocation23 + $0x150] sm:$0xff]
    %v1053 = vld [vmem:[#allocation23 + $0x158] sm:$0xff]
    %v1054 = vld [vmem:[#allocation23 + $0x160] sm:$0xff]
    %v1055 = vld [vmem:[#allocation23 + $0x168] sm:$0xff]
    %v1056 = vld [vmem:[#allocation23 + $0x170] sm:$0xff]
    %v1057 = vld [vmem:[#allocation23 + $0x178] sm:$0xff]
    %v1058 = vld [vmem:[#allocation23 + $0x180] sm:$0xff]
    %v1059 = vld [vmem:[#allocation23 + $0x188] sm:$0xff]
    %v1060 = vld [vmem:[#allocation23 + $0x190] sm:$0xff]
    %v1061 = vld [vmem:[#allocation23 + $0x198] sm:$0xff]
    %v1062 = vld [vmem:[#allocation23 + $0x1a0] sm:$0xff]
    %v1063 = vld [vmem:[#allocation23 + $0x1a8] sm:$0xff]
    %v1064 = vld [vmem:[#allocation23 + $0x1b0] sm:$0xff]
    %v1065 = vld [vmem:[#allocation23 + $0x1b8] sm:$0xff]
    %v1066 = vld [vmem:[#allocation23 + $0x1c0] sm:$0xff]
    %v1067 = vld [vmem:[#allocation23 + $0x1c8] sm:$0xff]
    %v1068 = vld [vmem:[#allocation23 + $0x1d0] sm:$0xff]
    %v1069 = vld [vmem:[#allocation23 + $0x1d8] sm:$0xff]
    %v1070 = vld [vmem:[#allocation23 + $0x1e0] sm:$0xff]
    %v1071 = vld [vmem:[#allocation23 + $0x1e8] sm:$0xff]
    %v1072 = vld [vmem:[#allocation23 + $0x1f0] sm:$0xff]
    %v1073 = vld [vmem:[#allocation23 + $0x1f8] sm:$0xff]
    %v1074 = vld [vmem:[#allocation23 + $0x200] sm:$0xff]
    %v1075 = vld [vmem:[#allocation23 + $0x208] sm:$0xff]
    %v1076 = vld [vmem:[#allocation23 + $0x210] sm:$0xff]
    %v1077 = vld [vmem:[#allocation23 + $0x218] sm:$0xff]
    %v1078 = vld [vmem:[#allocation23 + $0x220] sm:$0xff]
    %v1079 = vld [vmem:[#allocation23 + $0x228] sm:$0xff]
    %v1080 = vld [vmem:[#allocation23 + $0x230] sm:$0xff]
    %v1081 = vld [vmem:[#allocation23 + $0x238] sm:$0xff]
    %v1082 = vld [vmem:[#allocation23 + $0x240] sm:$0xff]
    %v1083 = vld [vmem:[#allocation23 + $0x248] sm:$0xff]
    %v1084 = vld [vmem:[#allocation23 + $0x250] sm:$0xff]
    %v1085 = vld [vmem:[#allocation23 + $0x258] sm:$0xff]
    %v1086 = vld [vmem:[#allocation23 + $0x260] sm:$0xff]
    %v1087 = vld [vmem:[#allocation23 + $0x268] sm:$0xff]
    %v1088 = vld [vmem:[#allocation23 + $0x270] sm:$0xff]
    %v1089 = vld [vmem:[#allocation23 + $0x278] sm:$0xff]
    %v1090 = vld [vmem:[#allocation23 + $0x280] sm:$0xff]
    %v1091 = vld [vmem:[#allocation23 + $0x288] sm:$0xff]
    %v1092 = vld [vmem:[#allocation23 + $0x290] sm:$0xff]
    %v1093 = vld [vmem:[#allocation23 + $0x298] sm:$0xff]
    %v1094 = vld [vmem:[#allocation23 + $0x2a0] sm:$0xff]
    %v1095 = vld [vmem:[#allocation23 + $0x2a8] sm:$0xff]
    %v1096 = vld [vmem:[#allocation23 + $0x2b0] sm:$0xff]
    %v1097 = vld [vmem:[#allocation23 + $0x2b8] sm:$0xff]
    %v1098 = vld [vmem:[#allocation23 + $0x2c0] sm:$0xff]
    %v1099 = vld [vmem:[#allocation23 + $0x2c8] sm:$0xff]
    %v1100 = vld [vmem:[#allocation23 + $0x2d0] sm:$0xff]
    %v1101 = vld [vmem:[#allocation23 + $0x2d8] sm:$0xff]
    %v1102 = vld [vmem:[#allocation23 + $0x2e0] sm:$0xff]
    %v1103 = vld [vmem:[#allocation23 + $0x2e8] sm:$0xff]
    %v1104 = vld [vmem:[#allocation23 + $0x2f0] sm:$0xff]
    %v1105 = vld [vmem:[#allocation23 + $0x2f8] sm:$0xff]
    %v1106 = vld [vmem:[#allocation23 + $0x300] sm:$0xff]
    %v1107 = vld [vmem:[#allocation23 + $0x308] sm:$0xff]
    %v1108 = vld [vmem:[#allocation23 + $0x310] sm:$0xff]
    %v1109 = vld [vmem:[#allocation23 + $0x318] sm:$0xff]
    %v1110 = vld [vmem:[#allocation23 + $0x320] sm:$0xff]
    %v1111 = vld [vmem:[#allocation23 + $0x328] sm:$0xff]
    %v1112 = vld [vmem:[#allocation23 + $0x330] sm:$0xff]
    %v1113 = vld [vmem:[#allocation23 + $0x338] sm:$0xff]
    %v1114 = vld [vmem:[#allocation23 + $0x340] sm:$0xff]
    %v1115 = vld [vmem:[#allocation23 + $0x348] sm:$0xff]
    %v1116 = vld [vmem:[#allocation23 + $0x350] sm:$0xff]
    %v1117 = vld [vmem:[#allocation23 + $0x358] sm:$0xff]
    %v1118 = vld [vmem:[#allocation23 + $0x360] sm:$0xff]
    %v1119 = vld [vmem:[#allocation23 + $0x368] sm:$0xff]
    %v1120 = vld [vmem:[#allocation23 + $0x370] sm:$0xff]
    %v1121 = vld [vmem:[#allocation23 + $0x378] sm:$0xff]
    %v1122 = vld [vmem:[#allocation23 + $0x380] sm:$0xff]
    %v1123 = vld [vmem:[#allocation23 + $0x388] sm:$0xff]
    %v1124 = vld [vmem:[#allocation23 + $0x390] sm:$0xff]
    %v1125 = vld [vmem:[#allocation23 + $0x398] sm:$0xff]
    %v1126 = vld [vmem:[#allocation23 + $0x3a0] sm:$0xff]
    %v1127 = vld [vmem:[#allocation23 + $0x3a8] sm:$0xff]
    %v1128 = vld [vmem:[#allocation23 + $0x3b0] sm:$0xff]
    %v1129 = vld [vmem:[#allocation23 + $0x3b8] sm:$0xff]
    %v1130 = vld [vmem:[#allocation23 + $0x3c0] sm:$0xff]
    %v1131 = vld [vmem:[#allocation23 + $0x3c8] sm:$0xff]
    %v1132 = vld [vmem:[#allocation23 + $0x3d0] sm:$0xff]
    %v1133 = vld [vmem:[#allocation23 + $0x3d8] sm:$0xff]
    %v1134 = vld [vmem:[#allocation23 + $0x3e0] sm:$0xff]
    %v1135 = vld [vmem:[#allocation23 + $0x3e8] sm:$0xff]
    %v1136 = vld [vmem:[#allocation23 + $0x3f0] sm:$0xff]
    %v1137 = vld [vmem:[#allocation23 + $0x3f8] sm:$0xff]
    %v1138 = vld [vmem:[#allocation23 + $0x400] sm:$0xff]
    %v1139 = vld [vmem:[#allocation23 + $0x408] sm:$0xff]
    %v1140 = vld [vmem:[#allocation23 + $0x410] sm:$0xff]
    %v1141 = vld [vmem:[#allocation23 + $0x418] sm:$0xff]
    %v1142 = vld [vmem:[#allocation23 + $0x420] sm:$0xff]
    %v1143 = vld [vmem:[#allocation23 + $0x428] sm:$0xff]
    %v1144 = vld [vmem:[#allocation23 + $0x430] sm:$0xff]
    %v1145 = vld [vmem:[#allocation23 + $0x438] sm:$0xff]
    %v1146 = vld [vmem:[#allocation23 + $0x440] sm:$0xff]
    %v1147 = vld [vmem:[#allocation23 + $0x448] sm:$0xff]
    %v1148 = vld [vmem:[#allocation23 + $0x450] sm:$0xff]
    %v1149 = vld [vmem:[#allocation23 + $0x458] sm:$0xff]
    %v1150 = vld [vmem:[#allocation23 + $0x460] sm:$0xff]
    %v1151 = vld [vmem:[#allocation23 + $0x468] sm:$0xff]
    %v1152 = vld [vmem:[#allocation23 + $0x470] sm:$0xff]
    %v1153 = vld [vmem:[#allocation23 + $0x478] sm:$0xff]
    %v1154 = vld [vmem:[#allocation23 + $0x480] sm:$0xff]
    %v1155 = vld [vmem:[#allocation23 + $0x488] sm:$0xff]
    %v1156 = vld [vmem:[#allocation23 + $0x490] sm:$0xff]
    %v1157 = vld [vmem:[#allocation23 + $0x498] sm:$0xff]
    %v1158 = vld [vmem:[#allocation23 + $0x4a0] sm:$0xff]
    %v1159 = vld [vmem:[#allocation23 + $0x4a8] sm:$0xff]
    %v1160 = vld [vmem:[#allocation23 + $0x4b0] sm:$0xff]
    %v1161 = vld [vmem:[#allocation23 + $0x4b8] sm:$0xff]
    %v1162 = vld [vmem:[#allocation23 + $0x4c0] sm:$0xff]
    %v1163 = vld [vmem:[#allocation23 + $0x4c8] sm:$0xff]
    %v1164 = vld [vmem:[#allocation23 + $0x4d0] sm:$0xff]
    %v1165 = vld [vmem:[#allocation23 + $0x4d8] sm:$0xff]
    %v1166 = vld [vmem:[#allocation23 + $0x4e0] sm:$0xff]
    %v1167 = vld [vmem:[#allocation23 + $0x4e8] sm:$0xff]
    %v1168 = vld [vmem:[#allocation23 + $0x4f0] sm:$0xff]
    %v1169 = vld [vmem:[#allocation23 + $0x4f8] sm:$0xff]
    %v1170 = vld [vmem:[#allocation23 + $0x500] sm:$0xff]
    %v1171 = vld [vmem:[#allocation23 + $0x508] sm:$0xff]
    %v1172 = vld [vmem:[#allocation23 + $0x510] sm:$0xff]
    %v1173 = vld [vmem:[#allocation23 + $0x518] sm:$0xff]
    %v1174 = vld [vmem:[#allocation23 + $0x520] sm:$0xff]
    %v1175 = vld [vmem:[#allocation23 + $0x528] sm:$0xff]
    %v1176 = vld [vmem:[#allocation23 + $0x530] sm:$0xff]
    %v1177 = vld [vmem:[#allocation23 + $0x538] sm:$0xff]
    %v1178 = vld [vmem:[#allocation23 + $0x540] sm:$0xff]
    %v1179 = vld [vmem:[#allocation23 + $0x548] sm:$0xff]
    %v1180 = vld [vmem:[#allocation23 + $0x550] sm:$0xff]
    %v1181 = vld [vmem:[#allocation23 + $0x558] sm:$0xff]
    %v1182 = vld [vmem:[#allocation23 + $0x560] sm:$0xff]
    %v1183 = vld [vmem:[#allocation23 + $0x568] sm:$0xff]
    %v1184 = vld [vmem:[#allocation23 + $0x570] sm:$0xff]
    %v1185 = vld [vmem:[#allocation23 + $0x578] sm:$0xff]
    %v1186 = vld [vmem:[#allocation23 + $0x580] sm:$0xff]
    %v1187 = vld [vmem:[#allocation23 + $0x588] sm:$0xff]
    %v1188 = vld [vmem:[#allocation23 + $0x590] sm:$0xff]
    %v1189 = vld [vmem:[#allocation23 + $0x598] sm:$0xff]
    %v1190 = vld [vmem:[#allocation23 + $0x5a0] sm:$0xff]
    %v1191 = vld [vmem:[#allocation23 + $0x5a8] sm:$0xff]
    %v1192 = vld [vmem:[#allocation23 + $0x5b0] sm:$0xff]
    %v1193 = vld [vmem:[#allocation23 + $0x5b8] sm:$0xff]
    %v1194 = vld [vmem:[#allocation23 + $0x5c0] sm:$0xff]
    %v1195 = vld [vmem:[#allocation23 + $0x5c8] sm:$0xff]
    %v1196 = vld [vmem:[#allocation23 + $0x5d0] sm:$0xff]
    %v1197 = vld [vmem:[#allocation23 + $0x5d8] sm:$0xff]
    %v1198 = vld [vmem:[#allocation23 + $0x5e0] sm:$0xff]
    %v1199 = vld [vmem:[#allocation23 + $0x5e8] sm:$0xff]
    %v1200 = vld [vmem:[#allocation23 + $0x5f0] sm:$0xff]
    %v1201 = vld [vmem:[#allocation23 + $0x5f8] sm:$0xff]
    %v1202 = vld [vmem:[#allocation23 + $0x600] sm:$0xff]
    %v1203 = vld [vmem:[#allocation23 + $0x608] sm:$0xff]
    %v1204 = vld [vmem:[#allocation23 + $0x610] sm:$0xff]
    %v1205 = vld [vmem:[#allocation23 + $0x618] sm:$0xff]
    %v1206 = vld [vmem:[#allocation23 + $0x620] sm:$0xff]
    %v1207 = vld [vmem:[#allocation23 + $0x628] sm:$0xff]
    %v1208 = vld [vmem:[#allocation23 + $0x630] sm:$0xff]
    %v1209 = vld [vmem:[#allocation23 + $0x638] sm:$0xff]
    %v1210 = vld [vmem:[#allocation23 + $0x640] sm:$0xff]
    %v1211 = vld [vmem:[#allocation23 + $0x648] sm:$0xff]
    %v1212 = vld [vmem:[#allocation23 + $0x650] sm:$0xff]
    %v1213 = vld [vmem:[#allocation23 + $0x658] sm:$0xff]
    %v1214 = vld [vmem:[#allocation23 + $0x660] sm:$0xff]
    %v1215 = vld [vmem:[#allocation23 + $0x668] sm:$0xff]
    %v1216 = vld [vmem:[#allocation23 + $0x670] sm:$0xff]
    %v1217 = vld [vmem:[#allocation23 + $0x678] sm:$0xff]
    %v1218 = vld [vmem:[#allocation23 + $0x680] sm:$0xff]
    %v1219 = vld [vmem:[#allocation23 + $0x688] sm:$0xff]
    %v1220 = vld [vmem:[#allocation23 + $0x690] sm:$0xff]
    %v1221 = vld [vmem:[#allocation23 + $0x698] sm:$0xff]
    %v1222 = vld [vmem:[#allocation23 + $0x6a0] sm:$0xff]
    %v1223 = vld [vmem:[#allocation23 + $0x6a8] sm:$0xff]
    %v1224 = vld [vmem:[#allocation23 + $0x6b0] sm:$0xff]
    %v1225 = vld [vmem:[#allocation23 + $0x6b8] sm:$0xff]
    %v1226 = vld [vmem:[#allocation23 + $0x6c0] sm:$0xff]
    %v1227 = vld [vmem:[#allocation23 + $0x6c8] sm:$0xff]
    %v1228 = vld [vmem:[#allocation23 + $0x6d0] sm:$0xff]
    %v1229 = vld [vmem:[#allocation23 + $0x6d8] sm:$0xff]
    %v1230 = vld [vmem:[#allocation23 + $0x6e0] sm:$0xff]
    %v1231 = vld [vmem:[#allocation23 + $0x6e8] sm:$0xff]
    %v1232 = vld [vmem:[#allocation23 + $0x6f0] sm:$0xff]
    %v1233 = vld [vmem:[#allocation23 + $0x6f8] sm:$0xff]
    %v1234 = vld [vmem:[#allocation23 + $0x700] sm:$0xff]
    %v1235 = vld [vmem:[#allocation23 + $0x708] sm:$0xff]
    %v1236 = vld [vmem:[#allocation23 + $0x710] sm:$0xff]
    %v1237 = vld [vmem:[#allocation23 + $0x718] sm:$0xff]
    %v1238 = vld [vmem:[#allocation23 + $0x720] sm:$0xff]
    %v1239 = vld [vmem:[#allocation23 + $0x728] sm:$0xff]
    %v1240 = vld [vmem:[#allocation23 + $0x730] sm:$0xff]
    %v1241 = vld [vmem:[#allocation23 + $0x738] sm:$0xff]
    %v1242 = vld [vmem:[#allocation23 + $0x740] sm:$0xff]
    %v1243 = vld [vmem:[#allocation23 + $0x748] sm:$0xff]
    %v1244 = vld [vmem:[#allocation23 + $0x750] sm:$0xff]
    %v1245 = vld [vmem:[#allocation23 + $0x758] sm:$0xff]
    %v1246 = vld [vmem:[#allocation23 + $0x760] sm:$0xff]
    %v1247 = vld [vmem:[#allocation23 + $0x768] sm:$0xff]
    %v1248 = vld [vmem:[#allocation23 + $0x770] sm:$0xff]
    %v1249 = vld [vmem:[#allocation23 + $0x778] sm:$0xff]
    %v1250 = vld [vmem:[#allocation23 + $0x780] sm:$0xff]
    %v1251 = vld [vmem:[#allocation23 + $0x788] sm:$0xff]
    %v1252 = vld [vmem:[#allocation23 + $0x790] sm:$0xff]
    %v1253 = vld [vmem:[#allocation23 + $0x798] sm:$0xff]
    %v1254 = vld [vmem:[#allocation23 + $0x7a0] sm:$0xff]
    %v1255 = vld [vmem:[#allocation23 + $0x7a8] sm:$0xff]
    %v1256 = vld [vmem:[#allocation23 + $0x7b0] sm:$0xff]
    %v1257 = vld [vmem:[#allocation23 + $0x7b8] sm:$0xff]
    %v1258 = vld [vmem:[#allocation23 + $0x7c0] sm:$0xff]
    %v1259 = vld [vmem:[#allocation23 + $0x7c8] sm:$0xff]
    %v1260 = vld [vmem:[#allocation23 + $0x7d0] sm:$0xff]
    %v1261 = vld [vmem:[#allocation23 + $0x7d8] sm:$0xff]
    %v1262 = vld [vmem:[#allocation23 + $0x7e0] sm:$0xff]
    %v1263 = vld [vmem:[#allocation23 + $0x7e8] sm:$0xff]
    %v1264 = vld [vmem:[#allocation23 + $0x7f0] sm:$0xff]
    %v1265 = vld [vmem:[#allocation23 + $0x7f8] sm:$0xff]
    %v1266 = vld [vmem:[#allocation23 + $0x800] sm:$0xff]
    %v1267 = vld [vmem:[#allocation23 + $0x808] sm:$0xff]
    %v1268 = vld [vmem:[#allocation23 + $0x810] sm:$0xff]
    %v1269 = vld [vmem:[#allocation23 + $0x818] sm:$0xff]
    %v1270 = vld [vmem:[#allocation23 + $0x820] sm:$0xff]
    %v1271 = vld [vmem:[#allocation23 + $0x828] sm:$0xff]
    %v1272 = vld [vmem:[#allocation23 + $0x830] sm:$0xff]
    %v1273 = vld [vmem:[#allocation23 + $0x838] sm:$0xff]
    %v1274 = vld [vmem:[#allocation23 + $0x840] sm:$0xff]
    %v1275 = vld [vmem:[#allocation23 + $0x848] sm:$0xff]
    %v1276 = vld [vmem:[#allocation23 + $0x850] sm:$0xff]
    %v1277 = vld [vmem:[#allocation23 + $0x858] sm:$0xff]
    %v1278 = vld [vmem:[#allocation23 + $0x860] sm:$0xff]
    %v1279 = vld [vmem:[#allocation23 + $0x868] sm:$0xff]
    %v1280 = vld [vmem:[#allocation23 + $0x870] sm:$0xff]
    %v1281 = vld [vmem:[#allocation23 + $0x878] sm:$0xff]
    %v1282 = vld [vmem:[#allocation23 + $0x880] sm:$0xff]
    %v1283 = vld [vmem:[#allocation23 + $0x888] sm:$0xff]
    %v1284 = vld [vmem:[#allocation23 + $0x890] sm:$0xff]
    %v1285 = vld [vmem:[#allocation23 + $0x898] sm:$0xff]
    %v1286 = vld [vmem:[#allocation23 + $0x8a0] sm:$0xff]
    %v1287 = vld [vmem:[#allocation23 + $0x8a8] sm:$0xff]
    %v1288 = vld [vmem:[#allocation23 + $0x8b0] sm:$0xff]
    %v1289 = vld [vmem:[#allocation23 + $0x8b8] sm:$0xff]
    %v1290 = vld [vmem:[#allocation23 + $0x8c0] sm:$0xff]
    %v1291 = vld [vmem:[#allocation23 + $0x8c8] sm:$0xff]
    %v1292 = vld [vmem:[#allocation23 + $0x8d0] sm:$0xff]
    %v1293 = vld [vmem:[#allocation23 + $0x8d8] sm:$0xff]
    %v1294 = vld [vmem:[#allocation23 + $0x8e0] sm:$0xff]
    %v1295 = vld [vmem:[#allocation23 + $0x8e8] sm:$0xff]
    %v1296 = vld [vmem:[#allocation23 + $0x8f0] sm:$0xff]
    %v1297 = vld [vmem:[#allocation23 + $0x8f8] sm:$0xff]
    %v1298 = vld [vmem:[#allocation23 + $0x900] sm:$0xff]
    %v1299 = vld [vmem:[#allocation23 + $0x908] sm:$0xff]
    %v1300 = vld [vmem:[#allocation23 + $0x910] sm:$0xff]
    %v1301 = vld [vmem:[#allocation23 + $0x918] sm:$0xff]
    %v1302 = vld [vmem:[#allocation23 + $0x920] sm:$0xff]
    %v1303 = vld [vmem:[#allocation23 + $0x928] sm:$0xff]
    %v1304 = vld [vmem:[#allocation23 + $0x930] sm:$0xff]
    %v1305 = vld [vmem:[#allocation23 + $0x938] sm:$0xff]
    %v1306 = vld [vmem:[#allocation23 + $0x940] sm:$0xff]
    %v1307 = vld [vmem:[#allocation23 + $0x948] sm:$0xff]
    %v1308 = vld [vmem:[#allocation23 + $0x950] sm:$0xff]
    %v1309 = vld [vmem:[#allocation23 + $0x958] sm:$0xff]
    %v1310 = vld [vmem:[#allocation23 + $0x960] sm:$0xff]
    %v1311 = vld [vmem:[#allocation23 + $0x968] sm:$0xff]
    %v1312 = vld [vmem:[#allocation23 + $0x970] sm:$0xff]
    %v1313 = vld [vmem:[#allocation23 + $0x978] sm:$0xff]
    %v1314 = vld [vmem:[#allocation23 + $0x980] sm:$0xff]
    %v1315 = vld [vmem:[#allocation23 + $0x988] sm:$0xff]
    %v1316 = vld [vmem:[#allocation23 + $0x990] sm:$0xff]
    %v1317 = vld [vmem:[#allocation23 + $0x998] sm:$0xff]
    %v1318 = vld [vmem:[#allocation23 + $0x9a0] sm:$0xff]
    %v1319 = vld [vmem:[#allocation23 + $0x9a8] sm:$0xff]
    %v1320 = vld [vmem:[#allocation23 + $0x9b0] sm:$0xff]
    %v1321 = vld [vmem:[#allocation23 + $0x9b8] sm:$0xff]
    %v1322 = vld [vmem:[#allocation23 + $0x9c0] sm:$0xff]
    %v1323 = vld [vmem:[#allocation23 + $0x9c8] sm:$0xff]
    %v1324 = vld [vmem:[#allocation23 + $0x9d0] sm:$0xff]
    %v1325 = vld [vmem:[#allocation23 + $0x9d8] sm:$0xff]
    %v1326 = vld [vmem:[#allocation23 + $0x9e0] sm:$0xff]
    %v1327 = vld [vmem:[#allocation23 + $0x9e8] sm:$0xff]
    %v1328 = vld [vmem:[#allocation23 + $0x9f0] sm:$0xff]
    %v1329 = vld [vmem:[#allocation23 + $0x9f8] sm:$0xff]
    %v1330 = vld [vmem:[#allocation23 + $0xa00] sm:$0xff]
    %v1331 = vld [vmem:[#allocation23 + $0xa08] sm:$0xff]
    %v1332 = vld [vmem:[#allocation23 + $0xa10] sm:$0xff]
    %v1333 = vld [vmem:[#allocation23 + $0xa18] sm:$0xff]
    %v1334 = vld [vmem:[#allocation23 + $0xa20] sm:$0xff]
    %v1335 = vld [vmem:[#allocation23 + $0xa28] sm:$0xff]
    %v1336 = vld [vmem:[#allocation23 + $0xa30] sm:$0xff]
    %v1337 = vld [vmem:[#allocation23 + $0xa38] sm:$0xff]
    %v1338 = vld [vmem:[#allocation23 + $0xa40] sm:$0xff]
    %v1339 = vld [vmem:[#allocation23 + $0xa48] sm:$0xff]
    %v1340 = vld [vmem:[#allocation23 + $0xa50] sm:$0xff]
    %v1341 = vld [vmem:[#allocation23 + $0xa58] sm:$0xff]
    %v1342 = vld [vmem:[#allocation23 + $0xa60] sm:$0xff]
    %v1343 = vld [vmem:[#allocation23 + $0xa68] sm:$0xff]
    %v1344 = vld [vmem:[#allocation23 + $0xa70] sm:$0xff]
    %v1345 = vld [vmem:[#allocation23 + $0xa78] sm:$0xff]
    %v1346 = vld [vmem:[#allocation23 + $0xa80] sm:$0xff]
    %v1347 = vld [vmem:[#allocation23 + $0xa88] sm:$0xff]
    %v1348 = vld [vmem:[#allocation23 + $0xa90] sm:$0xff]
    %v1349 = vld [vmem:[#allocation23 + $0xa98] sm:$0xff]
    %v1350 = vld [vmem:[#allocation23 + $0xaa0] sm:$0xff]
    %v1351 = vld [vmem:[#allocation23 + $0xaa8] sm:$0xff]
    %v1352 = vld [vmem:[#allocation23 + $0xab0] sm:$0xff]
    %v1353 = vld [vmem:[#allocation23 + $0xab8] sm:$0xff]
    %v1354 = vld [vmem:[#allocation23 + $0xac0] sm:$0xff]
    %v1355 = vld [vmem:[#allocation23 + $0xac8] sm:$0xff]
    %v1356 = vld [vmem:[#allocation23 + $0xad0] sm:$0xff]
    %v1357 = vld [vmem:[#allocation23 + $0xad8] sm:$0xff]
    %v1358 = vld [vmem:[#allocation23 + $0xae0] sm:$0xff]
    %v1359 = vld [vmem:[#allocation23 + $0xae8] sm:$0xff]
    %v1360 = vld [vmem:[#allocation23 + $0xaf0] sm:$0xff]
    %v1361 = vld [vmem:[#allocation23 + $0xaf8] sm:$0xff]
    %v1362 = vld [vmem:[#allocation23 + $0xb00] sm:$0xff]
    %v1363 = vld [vmem:[#allocation23 + $0xb08] sm:$0xff]
    %v1364 = vld [vmem:[#allocation23 + $0xb10] sm:$0xff]
    %v1365 = vld [vmem:[#allocation23 + $0xb18] sm:$0xff]
    %v1366 = vld [vmem:[#allocation23 + $0xb20] sm:$0xff]
    %v1367 = vld [vmem:[#allocation23 + $0xb28] sm:$0xff]
    %v1368 = vld [vmem:[#allocation23 + $0xb30] sm:$0xff]
    %v1369 = vld [vmem:[#allocation23 + $0xb38] sm:$0xff]
    %v1370 = vld [vmem:[#allocation23 + $0xb40] sm:$0xff]
    %v1371 = vld [vmem:[#allocation23 + $0xb48] sm:$0xff]
    %v1372 = vld [vmem:[#allocation23 + $0xb50] sm:$0xff]
    %v1373 = vld [vmem:[#allocation23 + $0xb58] sm:$0xff]
    %v1374 = vld [vmem:[#allocation23 + $0xb60] sm:$0xff]
    %v1375 = vld [vmem:[#allocation23 + $0xb68] sm:$0xff]
    %v1376 = vld [vmem:[#allocation23 + $0xb70] sm:$0xff]
    %v1377 = vld [vmem:[#allocation23 + $0xb78] sm:$0xff]
    %v1378 = vld [vmem:[#allocation23 + $0xb80] sm:$0xff]
    %v1379 = vld [vmem:[#allocation23 + $0xb88] sm:$0xff]
    %v1380 = vld [vmem:[#allocation23 + $0xb90] sm:$0xff]
    %v1381 = vld [vmem:[#allocation23 + $0xb98] sm:$0xff]
    %v1382 = vld [vmem:[#allocation23 + $0xba0] sm:$0xff]
    %v1383 = vld [vmem:[#allocation23 + $0xba8] sm:$0xff]
    %v1384 = vld [vmem:[#allocation23 + $0xbb0] sm:$0xff]
    %v1385 = vld [vmem:[#allocation23 + $0xbb8] sm:$0xff]
    %v1386 = vld [vmem:[#allocation23 + $0xbc0] sm:$0xff]
    %v1387 = vld [vmem:[#allocation23 + $0xbc8] sm:$0xff]
    %v1388 = vld [vmem:[#allocation23 + $0xbd0] sm:$0xff]
    %v1389 = vld [vmem:[#allocation23 + $0xbd8] sm:$0xff]
    %v1390 = vld [vmem:[#allocation23 + $0xbe0] sm:$0xff]
    %v1391 = vld [vmem:[#allocation23 + $0xbe8] sm:$0xff]
    %v1392 = vld [vmem:[#allocation23 + $0xbf0] sm:$0xff]
    %v1393 = vld [vmem:[#allocation23 + $0xbf8] sm:$0xff]
    %v1394 = vld [vmem:[#allocation23 + $0xc00] sm:$0xff]
    %v1395 = vld [vmem:[#allocation23 + $0xc08] sm:$0xff]
    %v1396 = vld [vmem:[#allocation23 + $0xc10] sm:$0xff]
    %v1397 = vld [vmem:[#allocation23 + $0xc18] sm:$0xff]
    %v1398 = vld [vmem:[#allocation23 + $0xc20] sm:$0xff]
    %v1399 = vld [vmem:[#allocation23 + $0xc28] sm:$0xff]
    %v1400 = vld [vmem:[#allocation23 + $0xc30] sm:$0xff]
    %v1401 = vld [vmem:[#allocation23 + $0xc38] sm:$0xff]
    %v1402 = vld [vmem:[#allocation23 + $0xc40] sm:$0xff]
    %v1403 = vld [vmem:[#allocation23 + $0xc48] sm:$0xff]
    %v1404 = vld [vmem:[#allocation23 + $0xc50] sm:$0xff]
    %v1405 = vld [vmem:[#allocation23 + $0xc58] sm:$0xff]
    %v1406 = vld [vmem:[#allocation23 + $0xc60] sm:$0xff]
    %v1407 = vld [vmem:[#allocation23 + $0xc68] sm:$0xff]
    %v1408 = vld [vmem:[#allocation23 + $0xc70] sm:$0xff]
    %v1409 = vld [vmem:[#allocation23 + $0xc78] sm:$0xff]
    %v1410 = vld [vmem:[#allocation23 + $0xc80] sm:$0xff]
    %v1411 = vld [vmem:[#allocation23 + $0xc88] sm:$0xff]
    %v1412 = vld [vmem:[#allocation23 + $0xc90] sm:$0xff]
    %v1413 = vld [vmem:[#allocation23 + $0xc98] sm:$0xff]
    %v1414 = vld [vmem:[#allocation23 + $0xca0] sm:$0xff]
    %v1415 = vld [vmem:[#allocation23 + $0xca8] sm:$0xff]
    %v1416 = vld [vmem:[#allocation23 + $0xcb0] sm:$0xff]
    %v1417 = vld [vmem:[#allocation23 + $0xcb8] sm:$0xff]
    %v1418 = vld [vmem:[#allocation23 + $0xcc0] sm:$0xff]
    %v1419 = vld [vmem:[#allocation23 + $0xcc8] sm:$0xff]
    %v1420 = vld [vmem:[#allocation23 + $0xcd0] sm:$0xff]
    %v1421 = vld [vmem:[#allocation23 + $0xcd8] sm:$0xff]
    %v1422 = vld [vmem:[#allocation23 + $0xce0] sm:$0xff]
    %v1423 = vld [vmem:[#allocation23 + $0xce8] sm:$0xff]
    %v1424 = vld [vmem:[#allocation23 + $0xcf0] sm:$0xff]
    %v1425 = vld [vmem:[#allocation23 + $0xcf8] sm:$0xff]
    %v1426 = vld [vmem:[#allocation23 + $0xd00] sm:$0xff]
    %v1427 = vld [vmem:[#allocation23 + $0xd08] sm:$0xff]
    %v1428 = vld [vmem:[#allocation23 + $0xd10] sm:$0xff]
    %v1429 = vld [vmem:[#allocation23 + $0xd18] sm:$0xff]
    %v1430 = vld [vmem:[#allocation23 + $0xd20] sm:$0xff]
    %v1431 = vld [vmem:[#allocation23 + $0xd28] sm:$0xff]
    %v1432 = vld [vmem:[#allocation23 + $0xd30] sm:$0xff]
    %v1433 = vld [vmem:[#allocation23 + $0xd38] sm:$0xff]
    %v1434 = vld [vmem:[#allocation23 + $0xd40] sm:$0xff]
    %v1435 = vld [vmem:[#allocation23 + $0xd48] sm:$0xff]
    %v1436 = vld [vmem:[#allocation23 + $0xd50] sm:$0xff]
    %v1437 = vld [vmem:[#allocation23 + $0xd58] sm:$0xff]
    %v1438 = vld [vmem:[#allocation23 + $0xd60] sm:$0xff]
    %v1439 = vld [vmem:[#allocation23 + $0xd68] sm:$0xff]
    %v1440 = vld [vmem:[#allocation23 + $0xd70] sm:$0xff]
    %v1441 = vld [vmem:[#allocation23 + $0xd78] sm:$0xff]
    %v1442 = vld [vmem:[#allocation23 + $0xd80] sm:$0xff]
    %v1443 = vld [vmem:[#allocation23 + $0xd88] sm:$0xff]
    %v1444 = vld [vmem:[#allocation23 + $0xd90] sm:$0xff]
    %v1445 = vld [vmem:[#allocation23 + $0xd98] sm:$0xff]
    %v1446 = vld [vmem:[#allocation23 + $0xda0] sm:$0xff]
    %v1447 = vld [vmem:[#allocation23 + $0xda8] sm:$0xff]
    %v1448 = vld [vmem:[#allocation23 + $0xdb0] sm:$0xff]
    %v1449 = vld [vmem:[#allocation23 + $0xdb8] sm:$0xff]
    %v1450 = vld [vmem:[#allocation23 + $0xdc0] sm:$0xff]
    %v1451 = vld [vmem:[#allocation23 + $0xdc8] sm:$0xff]
    %v1452 = vld [vmem:[#allocation23 + $0xdd0] sm:$0xff]
    %v1453 = vld [vmem:[#allocation23 + $0xdd8] sm:$0xff]
    %v1454 = vld [vmem:[#allocation23 + $0xde0] sm:$0xff]
    %v1455 = vld [vmem:[#allocation23 + $0xde8] sm:$0xff]
    %v1456 = vld [vmem:[#allocation23 + $0xdf0] sm:$0xff]
    %v1457 = vld [vmem:[#allocation23 + $0xdf8] sm:$0xff]
    %v1458 = vld [vmem:[#allocation23 + $0xe00] sm:$0xff]
    %v1459 = vld [vmem:[#allocation23 + $0xe08] sm:$0xff]
    %v1460 = vld [vmem:[#allocation23 + $0xe10] sm:$0xff]
    %v1461 = vld [vmem:[#allocation23 + $0xe18] sm:$0xff]
    %v1462 = vld [vmem:[#allocation23 + $0xe20] sm:$0xff]
    %v1463 = vld [vmem:[#allocation23 + $0xe28] sm:$0xff]
    %v1464 = vld [vmem:[#allocation23 + $0xe30] sm:$0xff]
    %v1465 = vld [vmem:[#allocation23 + $0xe38] sm:$0xff]
    %v1466 = vld [vmem:[#allocation23 + $0xe40] sm:$0xff]
    %v1467 = vld [vmem:[#allocation23 + $0xe48] sm:$0xff]
    %v1468 = vld [vmem:[#allocation23 + $0xe50] sm:$0xff]
    %v1469 = vld [vmem:[#allocation23 + $0xe58] sm:$0xff]
    %v1470 = vld [vmem:[#allocation23 + $0xe60] sm:$0xff]
    %v1471 = vld [vmem:[#allocation23 + $0xe68] sm:$0xff]
    %v1472 = vld [vmem:[#allocation23 + $0xe70] sm:$0xff]
    %v1473 = vld [vmem:[#allocation23 + $0xe78] sm:$0xff]
    %v1474 = vld [vmem:[#allocation23 + $0xe80] sm:$0xff]
    %v1475 = vld [vmem:[#allocation23 + $0xe88] sm:$0xff]
    %v1476 = vld [vmem:[#allocation23 + $0xe90] sm:$0xff]
    %v1477 = vld [vmem:[#allocation23 + $0xe98] sm:$0xff]
    %v1478 = vld [vmem:[#allocation23 + $0xea0] sm:$0xff]
    %v1479 = vld [vmem:[#allocation23 + $0xea8] sm:$0xff]
    %v1480 = vld [vmem:[#allocation23 + $0xeb0] sm:$0xff]
    %v1481 = vld [vmem:[#allocation23 + $0xeb8] sm:$0xff]
    %v1482 = vld [vmem:[#allocation23 + $0xec0] sm:$0xff]
    %v1483 = vld [vmem:[#allocation23 + $0xec8] sm:$0xff]
    %v1484 = vld [vmem:[#allocation23 + $0xed0] sm:$0xff]
    %v1485 = vld [vmem:[#allocation23 + $0xed8] sm:$0xff]
    %v1486 = vld [vmem:[#allocation23 + $0xee0] sm:$0xff]
    %v1487 = vld [vmem:[#allocation23 + $0xee8] sm:$0xff]
    %v1488 = vld [vmem:[#allocation23 + $0xef0] sm:$0xff]
    %v1489 = vld [vmem:[#allocation23 + $0xef8] sm:$0xff]
    %v1490 = vld [vmem:[#allocation23 + $0xf00] sm:$0xff]
    %v1491 = vld [vmem:[#allocation23 + $0xf08] sm:$0xff]
    %v1492 = vld [vmem:[#allocation23 + $0xf10] sm:$0xff]
    %v1493 = vld [vmem:[#allocation23 + $0xf18] sm:$0xff]
    %v1494 = vld [vmem:[#allocation23 + $0xf20] sm:$0xff]
    %v1495 = vld [vmem:[#allocation23 + $0xf28] sm:$0xff]
    %v1496 = vld [vmem:[#allocation23 + $0xf30] sm:$0xff]
    %v1497 = vld [vmem:[#allocation23 + $0xf38] sm:$0xff]
    %v1498 = vld [vmem:[#allocation23 + $0xf40] sm:$0xff]
    %v1499 = vld [vmem:[#allocation23 + $0xf48] sm:$0xff]
    %v1500 = vld [vmem:[#allocation23 + $0xf50] sm:$0xff]
    %v1501 = vld [vmem:[#allocation23 + $0xf58] sm:$0xff]
    %v1502 = vld [vmem:[#allocation23 + $0xf60] sm:$0xff]
    %v1503 = vld [vmem:[#allocation23 + $0xf68] sm:$0xff]
    %v1504 = vld [vmem:[#allocation23 + $0xf70] sm:$0xff]
    %v1505 = vld [vmem:[#allocation23 + $0xf78] sm:$0xff]
    %v1506 = vld [vmem:[#allocation23 + $0xf80] sm:$0xff]
    %v1507 = vld [vmem:[#allocation23 + $0xf88] sm:$0xff]
    %v1508 = vld [vmem:[#allocation23 + $0xf90] sm:$0xff]
    %v1509 = vld [vmem:[#allocation23 + $0xf98] sm:$0xff]
    %v1510 = vld [vmem:[#allocation23 + $0xfa0] sm:$0xff]
    %v1511 = vld [vmem:[#allocation23 + $0xfa8] sm:$0xff]
    %v1512 = vld [vmem:[#allocation23 + $0xfb0] sm:$0xff]
    %v1513 = vld [vmem:[#allocation23 + $0xfb8] sm:$0xff]
    %v1514 = vld [vmem:[#allocation23 + $0xfc0] sm:$0xff]
    %v1515 = vld [vmem:[#allocation23 + $0xfc8] sm:$0xff]
    %v1516 = vld [vmem:[#allocation23 + $0xfd0] sm:$0xff]
    %v1517 = vld [vmem:[#allocation23 + $0xfd8] sm:$0xff]
    %v1518 = vld [vmem:[#allocation23 + $0xfe0] sm:$0xff]
    %v1519 = vld [vmem:[#allocation23 + $0xfe8] sm:$0xff]
    %v1520 = vld [vmem:[#allocation23 + $0xff0] sm:$0xff]
    %v1521 = vld [vmem:[#allocation23 + $0xff8] sm:$0xff]
    %v1522 = vld [vmem:[#allocation25] sm:$0xff]
    %v1524 = vlaneseq
    %v1525 = vshrl.u32 %v1524, 7
    %v1526 = vsub.s32 0, %v1525
    %v1527 = vrot.slane %v1522, %v1526
    %v1528 = vlaneseq
    %v1529 = vshrl.u32 %v1528, 7
    %v1530 = vsub.s32 1, %v1529
    %v1531 = vrot.slane %v1522, %v1530
    %v1532 = vlaneseq
    %v1533 = vshrl.u32 %v1532, 7
    %v1534 = vsub.s32 2, %v1533
    %v1535 = vrot.slane %v1522, %v1534
    %v1536 = vlaneseq
    %v1537 = vshrl.u32 %v1536, 7
    %v1538 = vsub.s32 3, %v1537
    %v1539 = vrot.slane %v1522, %v1538
    %v1540 = vlaneseq
    %v1541 = vshrl.u32 %v1540, 7
    %v1542 = vsub.s32 4, %v1541
    %v1543 = vrot.slane %v1522, %v1542
    %v1544 = vlaneseq
    %v1545 = vshrl.u32 %v1544, 7
    %v1546 = vsub.s32 5, %v1545
    %v1547 = vrot.slane %v1522, %v1546
    %v1548 = vlaneseq
    %v1549 = vshrl.u32 %v1548, 7
    %v1550 = vsub.s32 6, %v1549
    %v1551 = vrot.slane %v1522, %v1550
    %v1552 = vlaneseq
    %v1553 = vshrl.u32 %v1552, 7
    %v1554 = vsub.s32 7, %v1553
    %v1555 = vrot.slane %v1522, %v1554
    %1564 = vmatprep.subr.mxu0 %v1131
    %1565 = vmatpush1.msra.mxu0 %v1130
    %1566 = vmatprep.subr.mxu0 %v1123
    %1567 = vmatpush1.msra.mxu0 %v1122
    %1568 = vmatprep.subr.mxu0 %v1115
    %1569 = vmatpush1.msra.mxu0 %v1114
    %1570 = vmatprep.subr.mxu0 %v1107
    %1571 = vmatpush1.msra.mxu0 %v1106
    %1572 = vmatprep.subr.mxu0 %v1099
    %1573 = vmatpush1.msra.mxu0 %v1098
    %1574 = vmatprep.subr.mxu0 %v1091
    %1575 = vmatpush1.msra.mxu0 %v1090
    %1576 = vmatprep.subr.mxu0 %v1083
    %1577 = vmatpush1.msra.mxu0 %v1082
    %1578 = vmatprep.subr.mxu0 %v1075
    %1579 = vmatpush1.msra.mxu0 %v1074
    %1580 = vmatprep.subr.mxu0 %v1067
    %1581 = vmatpush1.msra.mxu0 %v1066
    %1582 = vmatprep.subr.mxu0 %v1059
    %1583 = vmatpush1.msra.mxu0 %v1058
    %1584 = vmatprep.subr.mxu0 %v1051
    %1585 = vmatpush1.msra.mxu0 %v1050
    %1586 = vmatprep.subr.mxu0 %v1043
    %1587 = vmatpush1.msra.mxu0 %v1042
    %1588 = vmatprep.subr.mxu0 %v1035
    %1589 = vmatpush1.msra.mxu0 %v1034
    %1590 = vmatprep.subr.mxu0 %v1027
    %1591 = vmatpush1.msra.mxu0 %v1026
    %1592 = vmatprep.subr.mxu0 %v1019
    %1593 = vmatpush1.msra.mxu0 %v1018
    %1594 = vmatprep.subr.mxu0 %v1011
    %1595 = vmatpush1.msra.mxu0 %v1010
    %1596 = vmatprep.subr.mxu0 %v1259
    %1597 = vmatpush2.msra.mxu0 %v1258
    %1598 = vmatprep.subr.mxu0 %v1251
    %1599 = vmatpush2.msra.mxu0 %v1250
    %1600 = vmatprep.subr.mxu0 %v1243
    %1601 = vmatpush2.msra.mxu0 %v1242
    %1602 = vmatprep.subr.mxu0 %v1235
    %1603 = vmatpush2.msra.mxu0 %v1234
    %1604 = vmatprep.subr.mxu0 %v1227
    %1605 = vmatpush2.msra.mxu0 %v1226
    %1606 = vmatprep.subr.mxu0 %v1219
    %1607 = vmatpush2.msra.mxu0 %v1218
    %1608 = vmatprep.subr.mxu0 %v1211
    %1609 = vmatpush2.msra.mxu0 %v1210
    %1610 = vmatprep.subr.mxu0 %v1203
    %1611 = vmatpush2.msra.mxu0 %v1202
    %1612 = vmatprep.subr.mxu0 %v1195
    %1613 = vmatpush2.msra.mxu0 %v1194
    %1614 = vmatprep.subr.mxu0 %v1187
    %1615 = vmatpush2.msra.mxu0 %v1186
    %1616 = vmatprep.subr.mxu0 %v1179
    %1617 = vmatpush2.msra.mxu0 %v1178
    %1618 = vmatprep.subr.mxu0 %v1171
    %1619 = vmatpush2.msra.mxu0 %v1170
    %1620 = vmatprep.subr.mxu0 %v1163
    %1621 = vmatpush2.msra.mxu0 %v1162
    %1622 = vmatprep.subr.mxu0 %v1155
    %1623 = vmatpush2.msra.mxu0 %v1154
    %1624 = vmatprep.subr.mxu0 %v1147
    %1625 = vmatpush2.msra.mxu0 %v1146
    %1626 = vmatprep.subr.mxu0 %v1139
    %1627 = vmatpush2.msra.mxu0 %v1138
    %1628 = vmatprep.mubr.f32.mxu0 %v1007
    %1629 = vmatmul.mubr.f32.gmra.mxu0 %v1006
    %v1630 = vpop.f32.mrf.mxu0
    %v1631 = vadd.f32 %v1527, %v1630
    %v1632 = vpop.f32.mrf.mxu0
    %v1633 = vadd.f32 %v1531, %v1632
    %1634 = vdwg.mxu0
    %1635 = vmatprep.subr.mxu0 %v1387
    %1636 = vmatpush1.msra.mxu0 %v1386
    %1637 = vmatprep.subr.mxu0 %v1379
    %1638 = vmatpush1.msra.mxu0 %v1378
    %1639 = vmatprep.subr.mxu0 %v1371
    %1640 = vmatpush1.msra.mxu0 %v1370
    %1641 = vmatprep.subr.mxu0 %v1363
    %1642 = vmatpush1.msra.mxu0 %v1362
    %1643 = vmatprep.subr.mxu0 %v1355
    %1644 = vmatpush1.msra.mxu0 %v1354
    %1645 = vmatprep.subr.mxu0 %v1347
    %1646 = vmatpush1.msra.mxu0 %v1346
    %1647 = vmatprep.subr.mxu0 %v1339
    %1648 = vmatpush1.msra.mxu0 %v1338
    %1649 = vmatprep.subr.mxu0 %v1331
    %1650 = vmatpush1.msra.mxu0 %v1330
    %1651 = vmatprep.subr.mxu0 %v1323
    %1652 = vmatpush1.msra.mxu0 %v1322
    %1653 = vmatprep.subr.mxu0 %v1315
    %1654 = vmatpush1.msra.mxu0 %v1314
    %1655 = vmatprep.subr.mxu0 %v1307
    %1656 = vmatpush1.msra.mxu0 %v1306
    %1657 = vmatprep.subr.mxu0 %v1299
    %1658 = vmatpush1.msra.mxu0 %v1298
    %1659 = vmatprep.subr.mxu0 %v1291
    %1660 = vmatpush1.msra.mxu0 %v1290
    %1661 = vmatprep.subr.mxu0 %v1283
    %1662 = vmatpush1.msra.mxu0 %v1282
    %1663 = vmatprep.subr.mxu0 %v1275
    %1664 = vmatpush1.msra.mxu0 %v1274
    %1665 = vmatprep.subr.mxu0 %v1267
    %1666 = vmatpush1.msra.mxu0 %v1266
    %1667 = vmatprep.subr.mxu0 %v1515
    %1668 = vmatpush2.msra.mxu0 %v1514
    %1669 = vmatprep.subr.mxu0 %v1507
    %1670 = vmatpush2.msra.mxu0 %v1506
    %1671 = vmatprep.subr.mxu0 %v1499
    %1672 = vmatpush2.msra.mxu0 %v1498
    %1673 = vmatprep.subr.mxu0 %v1491
    %1674 = vmatpush2.msra.mxu0 %v1490
    %1675 = vmatprep.subr.mxu0 %v1483
    %1676 = vmatpush2.msra.mxu0 %v1482
    %1677 = vmatprep.subr.mxu0 %v1475
    %1678 = vmatpush2.msra.mxu0 %v1474
    %1679 = vmatprep.subr.mxu0 %v1467
    %1680 = vmatpush2.msra.mxu0 %v1466
    %1681 = vmatprep.subr.mxu0 %v1459
    %1682 = vmatpush2.msra.mxu0 %v1458
    %1683 = vmatprep.subr.mxu0 %v1451
    %1684 = vmatpush2.msra.mxu0 %v1450
    %1685 = vmatprep.subr.mxu0 %v1443
    %1686 = vmatpush2.msra.mxu0 %v1442
    %1687 = vmatprep.subr.mxu0 %v1435
    %1688 = vmatpush2.msra.mxu0 %v1434
    %1689 = vmatprep.subr.mxu0 %v1427
    %1690 = vmatpush2.msra.mxu0 %v1426
    %1691 = vmatprep.subr.mxu0 %v1419
    %1692 = vmatpush2.msra.mxu0 %v1418
    %1693 = vmatprep.subr.mxu0 %v1411
    %1694 = vmatpush2.msra.mxu0 %v1410
    %1695 = vmatprep.subr.mxu0 %v1403
    %1696 = vmatpush2.msra.mxu0 %v1402
    %1697 = vmatprep.subr.mxu0 %v1395
    %1698 = vmatpush2.msra.mxu0 %v1394
    %1699 = vmatprep.mubr.f32.mxu0 %v1009
    %1700 = vmatmul.mubr.f32.gmra.mxu0 %v1008
    %v1701 = vpop.f32.mrf.mxu0
    %v1702 = vadd.f32 %v1631, %v1701
    %v1703 = vpop.f32.mrf.mxu0
    %v1704 = vadd.f32 %v1633, %v1703
    %1705 = vdwg.mxu0
    %1706 = vmatprep.subr.mxu0 %v1133
    %1707 = vmatpush1.msra.mxu0 %v1132
    %1708 = vmatprep.subr.mxu0 %v1125
    %1709 = vmatpush1.msra.mxu0 %v1124
    %1710 = vmatprep.subr.mxu0 %v1117
    %1711 = vmatpush1.msra.mxu0 %v1116
    %1712 = vmatprep.subr.mxu0 %v1109
    %1713 = vmatpush1.msra.mxu0 %v1108
    %1714 = vmatprep.subr.mxu0 %v1101
    %1715 = vmatpush1.msra.mxu0 %v1100
    %1716 = vmatprep.subr.mxu0 %v1093
    %1717 = vmatpush1.msra.mxu0 %v1092
    %1718 = vmatprep.subr.mxu0 %v1085
    %1719 = vmatpush1.msra.mxu0 %v1084
    %1720 = vmatprep.subr.mxu0 %v1077
    %1721 = vmatpush1.msra.mxu0 %v1076
    %1722 = vmatprep.subr.mxu0 %v1069
    %1723 = vmatpush1.msra.mxu0 %v1068
    %1724 = vmatprep.subr.mxu0 %v1061
    %1725 = vmatpush1.msra.mxu0 %v1060
    %1726 = vmatprep.subr.mxu0 %v1053
    %1727 = vmatpush1.msra.mxu0 %v1052
    %1728 = vmatprep.subr.mxu0 %v1045
    %1729 = vmatpush1.msra.mxu0 %v1044
    %1730 = vmatprep.subr.mxu0 %v1037
    %1731 = vmatpush1.msra.mxu0 %v1036
    %1732 = vmatprep.subr.mxu0 %v1029
    %1733 = vmatpush1.msra.mxu0 %v1028
    %1734 = vmatprep.subr.mxu0 %v1021
    %1735 = vmatpush1.msra.mxu0 %v1020
    %1736 = vmatprep.subr.mxu0 %v1013
    %1737 = vmatpush1.msra.mxu0 %v1012
    %1738 = vmatprep.subr.mxu0 %v1261
    %1739 = vmatpush2.msra.mxu0 %v1260
    %1740 = vmatprep.subr.mxu0 %v1253
    %1741 = vmatpush2.msra.mxu0 %v1252
    %1742 = vmatprep.subr.mxu0 %v1245
    %1743 = vmatpush2.msra.mxu0 %v1244
    %1744 = vmatprep.subr.mxu0 %v1237
    %1745 = vmatpush2.msra.mxu0 %v1236
    %1746 = vmatprep.subr.mxu0 %v1229
    %1747 = vmatpush2.msra.mxu0 %v1228
    %1748 = vmatprep.subr.mxu0 %v1221
    %1749 = vmatpush2.msra.mxu0 %v1220
    %1750 = vmatprep.subr.mxu0 %v1213
    %1751 = vmatpush2.msra.mxu0 %v1212
    %1752 = vmatprep.subr.mxu0 %v1205
    %1753 = vmatpush2.msra.mxu0 %v1204
    %1754 = vmatprep.subr.mxu0 %v1197
    %1755 = vmatpush2.msra.mxu0 %v1196
    %1756 = vmatprep.subr.mxu0 %v1189
    %1757 = vmatpush2.msra.mxu0 %v1188
    %1758 = vmatprep.subr.mxu0 %v1181
    %1759 = vmatpush2.msra.mxu0 %v1180
    %1760 = vmatprep.subr.mxu0 %v1173
    %1761 = vmatpush2.msra.mxu0 %v1172
    %1762 = vmatprep.subr.mxu0 %v1165
    %1763 = vmatpush2.msra.mxu0 %v1164
    %1764 = vmatprep.subr.mxu0 %v1157
    %1765 = vmatpush2.msra.mxu0 %v1156
    %1766 = vmatprep.subr.mxu0 %v1149
    %1767 = vmatpush2.msra.mxu0 %v1148
    %1768 = vmatprep.subr.mxu0 %v1141
    %1769 = vmatpush2.msra.mxu0 %v1140
    %1770 = vmatprep.mubr.f32.mxu0 %v1007
    %1771 = vmatmul.mubr.f32.gmra.mxu0 %v1006
    %v1772 = vpop.f32.mrf.mxu0
    %v1773 = vadd.f32 %v1535, %v1772
    %v1774 = vpop.f32.mrf.mxu0
    %v1775 = vadd.f32 %v1539, %v1774
    %1776 = vdwg.mxu0
    %1777 = vmatprep.subr.mxu0 %v1389
    %1778 = vmatpush1.msra.mxu0 %v1388
    %1779 = vmatprep.subr.mxu0 %v1381
    %1780 = vmatpush1.msra.mxu0 %v1380
    %1781 = vmatprep.subr.mxu0 %v1373
    %1782 = vmatpush1.msra.mxu0 %v1372
    %1783 = vmatprep.subr.mxu0 %v1365
    %1784 = vmatpush1.msra.mxu0 %v1364
    %1785 = vmatprep.subr.mxu0 %v1357
    %1786 = vmatpush1.msra.mxu0 %v1356
    %1787 = vmatprep.subr.mxu0 %v1349
    %1788 = vmatpush1.msra.mxu0 %v1348
    %1789 = vmatprep.subr.mxu0 %v1341
    %1790 = vmatpush1.msra.mxu0 %v1340
    %1791 = vmatprep.subr.mxu0 %v1333
    %1792 = vmatpush1.msra.mxu0 %v1332
    %1793 = vmatprep.subr.mxu0 %v1325
    %1794 = vmatpush1.msra.mxu0 %v1324
    %1795 = vmatprep.subr.mxu0 %v1317
    %1796 = vmatpush1.msra.mxu0 %v1316
    %1797 = vmatprep.subr.mxu0 %v1309
    %1798 = vmatpush1.msra.mxu0 %v1308
    %1799 = vmatprep.subr.mxu0 %v1301
    %1800 = vmatpush1.msra.mxu0 %v1300
    %1801 = vmatprep.subr.mxu0 %v1293
    %1802 = vmatpush1.msra.mxu0 %v1292
    %1803 = vmatprep.subr.mxu0 %v1285
    %1804 = vmatpush1.msra.mxu0 %v1284
    %1805 = vmatprep.subr.mxu0 %v1277
    %1806 = vmatpush1.msra.mxu0 %v1276
    %1807 = vmatprep.subr.mxu0 %v1269
    %1808 = vmatpush1.msra.mxu0 %v1268
    %1809 = vmatprep.subr.mxu0 %v1517
    %1810 = vmatpush2.msra.mxu0 %v1516
    %1811 = vmatprep.subr.mxu0 %v1509
    %1812 = vmatpush2.msra.mxu0 %v1508
    %1813 = vmatprep.subr.mxu0 %v1501
    %1814 = vmatpush2.msra.mxu0 %v1500
    %1815 = vmatprep.subr.mxu0 %v1493
    %1816 = vmatpush2.msra.mxu0 %v1492
    %1817 = vmatprep.subr.mxu0 %v1485
    %1818 = vmatpush2.msra.mxu0 %v1484
    %1819 = vmatprep.subr.mxu0 %v1477
    %1820 = vmatpush2.msra.mxu0 %v1476
    %1821 = vmatprep.subr.mxu0 %v1469
    %1822 = vmatpush2.msra.mxu0 %v1468
    %1823 = vmatprep.subr.mxu0 %v1461
    %1824 = vmatpush2.msra.mxu0 %v1460
    %1825 = vmatprep.subr.mxu0 %v1453
    %1826 = vmatpush2.msra.mxu0 %v1452
    %1827 = vmatprep.subr.mxu0 %v1445
    %1828 = vmatpush2.msra.mxu0 %v1444
    %1829 = vmatprep.subr.mxu0 %v1437
    %1830 = vmatpush2.msra.mxu0 %v1436
    %1831 = vmatprep.subr.mxu0 %v1429
    %1832 = vmatpush2.msra.mxu0 %v1428
    %1833 = vmatprep.subr.mxu0 %v1421
    %1834 = vmatpush2.msra.mxu0 %v1420
    %1835 = vmatprep.subr.mxu0 %v1413
    %1836 = vmatpush2.msra.mxu0 %v1412
    %1837 = vmatprep.subr.mxu0 %v1405
    %1838 = vmatpush2.msra.mxu0 %v1404
    %1839 = vmatprep.subr.mxu0 %v1397
    %1840 = vmatpush2.msra.mxu0 %v1396
    %1841 = vmatprep.mubr.f32.mxu0 %v1009
    %1842 = vmatmul.mubr.f32.gmra.mxu0 %v1008
    %v1843 = vpop.f32.mrf.mxu0
    %v1844 = vadd.f32 %v1773, %v1843
    %v1845 = vpop.f32.mrf.mxu0
    %v1846 = vadd.f32 %v1775, %v1845
    %1847 = vdwg.mxu0
    %1848 = vmatprep.subr.mxu0 %v1135
    %1849 = vmatpush1.msra.mxu0 %v1134
    %1850 = vmatprep.subr.mxu0 %v1127
    %1851 = vmatpush1.msra.mxu0 %v1126
    %1852 = vmatprep.subr.mxu0 %v1119
    %1853 = vmatpush1.msra.mxu0 %v1118
    %1854 = vmatprep.subr.mxu0 %v1111
    %1855 = vmatpush1.msra.mxu0 %v1110
    %1856 = vmatprep.subr.mxu0 %v1103
    %1857 = vmatpush1.msra.mxu0 %v1102
    %1858 = vmatprep.subr.mxu0 %v1095
    %1859 = vmatpush1.msra.mxu0 %v1094
    %1860 = vmatprep.subr.mxu0 %v1087
    %1861 = vmatpush1.msra.mxu0 %v1086
    %1862 = vmatprep.subr.mxu0 %v1079
    %1863 = vmatpush1.msra.mxu0 %v1078
    %1864 = vmatprep.subr.mxu0 %v1071
    %1865 = vmatpush1.msra.mxu0 %v1070
    %1866 = vmatprep.subr.mxu0 %v1063
    %1867 = vmatpush1.msra.mxu0 %v1062
    %1868 = vmatprep.subr.mxu0 %v1055
    %1869 = vmatpush1.msra.mxu0 %v1054
    %1870 = vmatprep.subr.mxu0 %v1047
    %1871 = vmatpush1.msra.mxu0 %v1046
    %1872 = vmatprep.subr.mxu0 %v1039
    %1873 = vmatpush1.msra.mxu0 %v1038
    %1874 = vmatprep.subr.mxu0 %v1031
    %1875 = vmatpush1.msra.mxu0 %v1030
    %1876 = vmatprep.subr.mxu0 %v1023
    %1877 = vmatpush1.msra.mxu0 %v1022
    %1878 = vmatprep.subr.mxu0 %v1015
    %1879 = vmatpush1.msra.mxu0 %v1014
    %1880 = vmatprep.subr.mxu0 %v1263
    %1881 = vmatpush2.msra.mxu0 %v1262
    %1882 = vmatprep.subr.mxu0 %v1255
    %1883 = vmatpush2.msra.mxu0 %v1254
    %1884 = vmatprep.subr.mxu0 %v1247
    %1885 = vmatpush2.msra.mxu0 %v1246
    %1886 = vmatprep.subr.mxu0 %v1239
    %1887 = vmatpush2.msra.mxu0 %v1238
    %1888 = vmatprep.subr.mxu0 %v1231
    %1889 = vmatpush2.msra.mxu0 %v1230
    %1890 = vmatprep.subr.mxu0 %v1223
    %1891 = vmatpush2.msra.mxu0 %v1222
    %1892 = vmatprep.subr.mxu0 %v1215
    %1893 = vmatpush2.msra.mxu0 %v1214
    %1894 = vmatprep.subr.mxu0 %v1207
    %1895 = vmatpush2.msra.mxu0 %v1206
    %1896 = vmatprep.subr.mxu0 %v1199
    %1897 = vmatpush2.msra.mxu0 %v1198
    %1898 = vmatprep.subr.mxu0 %v1191
    %1899 = vmatpush2.msra.mxu0 %v1190
    %1900 = vmatprep.subr.mxu0 %v1183
    %1901 = vmatpush2.msra.mxu0 %v1182
    %1902 = vmatprep.subr.mxu0 %v1175
    %1903 = vmatpush2.msra.mxu0 %v1174
    %1904 = vmatprep.subr.mxu0 %v1167
    %1905 = vmatpush2.msra.mxu0 %v1166
    %1906 = vmatprep.subr.mxu0 %v1159
    %1907 = vmatpush2.msra.mxu0 %v1158
    %1908 = vmatprep.subr.mxu0 %v1151
    %1909 = vmatpush2.msra.mxu0 %v1150
    %1910 = vmatprep.subr.mxu0 %v1143
    %1911 = vmatpush2.msra.mxu0 %v1142
    %1912 = vmatprep.mubr.f32.mxu0 %v1007
    %1913 = vmatmul.mubr.f32.gmra.mxu0 %v1006
    %v1914 = vpop.f32.mrf.mxu0
    %v1915 = vadd.f32 %v1543, %v1914
    %v1916 = vpop.f32.mrf.mxu0
    %v1917 = vadd.f32 %v1547, %v1916
    %1918 = vdwg.mxu0
    %1919 = vmatprep.subr.mxu0 %v1391
    %1920 = vmatpush1.msra.mxu0 %v1390
    %1921 = vmatprep.subr.mxu0 %v1383
    %1922 = vmatpush1.msra.mxu0 %v1382
    %1923 = vmatprep.subr.mxu0 %v1375
    %1924 = vmatpush1.msra.mxu0 %v1374
    %1925 = vmatprep.subr.mxu0 %v1367
    %1926 = vmatpush1.msra.mxu0 %v1366
    %1927 = vmatprep.subr.mxu0 %v1359
    %1928 = vmatpush1.msra.mxu0 %v1358
    %1929 = vmatprep.subr.mxu0 %v1351
    %1930 = vmatpush1.msra.mxu0 %v1350
    %1931 = vmatprep.subr.mxu0 %v1343
    %1932 = vmatpush1.msra.mxu0 %v1342
    %1933 = vmatprep.subr.mxu0 %v1335
    %1934 = vmatpush1.msra.mxu0 %v1334
    %1935 = vmatprep.subr.mxu0 %v1327
    %1936 = vmatpush1.msra.mxu0 %v1326
    %1937 = vmatprep.subr.mxu0 %v1319
    %1938 = vmatpush1.msra.mxu0 %v1318
    %1939 = vmatprep.subr.mxu0 %v1311
    %1940 = vmatpush1.msra.mxu0 %v1310
    %1941 = vmatprep.subr.mxu0 %v1303
    %1942 = vmatpush1.msra.mxu0 %v1302
    %1943 = vmatprep.subr.mxu0 %v1295
    %1944 = vmatpush1.msra.mxu0 %v1294
    %1945 = vmatprep.subr.mxu0 %v1287
    %1946 = vmatpush1.msra.mxu0 %v1286
    %1947 = vmatprep.subr.mxu0 %v1279
    %1948 = vmatpush1.msra.mxu0 %v1278
    %1949 = vmatprep.subr.mxu0 %v1271
    %1950 = vmatpush1.msra.mxu0 %v1270
    %1951 = vmatprep.subr.mxu0 %v1519
    %1952 = vmatpush2.msra.mxu0 %v1518
    %1953 = vmatprep.subr.mxu0 %v1511
    %1954 = vmatpush2.msra.mxu0 %v1510
    %1955 = vmatprep.subr.mxu0 %v1503
    %1956 = vmatpush2.msra.mxu0 %v1502
    %1957 = vmatprep.subr.mxu0 %v1495
    %1958 = vmatpush2.msra.mxu0 %v1494
    %1959 = vmatprep.subr.mxu0 %v1487
    %1960 = vmatpush2.msra.mxu0 %v1486
    %1961 = vmatprep.subr.mxu0 %v1479
    %1962 = vmatpush2.msra.mxu0 %v1478
    %1963 = vmatprep.subr.mxu0 %v1471
    %1964 = vmatpush2.msra.mxu0 %v1470
    %1965 = vmatprep.subr.mxu0 %v1463
    %1966 = vmatpush2.msra.mxu0 %v1462
    %1967 = vmatprep.subr.mxu0 %v1455
    %1968 = vmatpush2.msra.mxu0 %v1454
    %1969 = vmatprep.subr.mxu0 %v1447
    %1970 = vmatpush2.msra.mxu0 %v1446
    %1971 = vmatprep.subr.mxu0 %v1439
    %1972 = vmatpush2.msra.mxu0 %v1438
    %1973 = vmatprep.subr.mxu0 %v1431
    %1974 = vmatpush2.msra.mxu0 %v1430
    %1975 = vmatprep.subr.mxu0 %v1423
    %1976 = vmatpush2.msra.mxu0 %v1422
    %1977 = vmatprep.subr.mxu0 %v1415
    %1978 = vmatpush2.msra.mxu0 %v1414
    %1979 = vmatprep.subr.mxu0 %v1407
    %1980 = vmatpush2.msra.mxu0 %v1406
    %1981 = vmatprep.subr.mxu0 %v1399
    %1982 = vmatpush2.msra.mxu0 %v1398
    %1983 = vmatprep.mubr.f32.mxu0 %v1009
    %1984 = vmatmul.mubr.f32.gmra.mxu0 %v1008
    %v1985 = vpop.f32.mrf.mxu0
    %v1986 = vadd.f32 %v1915, %v1985
    %v1987 = vpop.f32.mrf.mxu0
    %v1988 = vadd.f32 %v1917, %v1987
    %1989 = vdwg.mxu0
    %1990 = vmatprep.subr.mxu0 %v1137
    %1991 = vmatpush1.msra.mxu0 %v1136
    %1992 = vmatprep.subr.mxu0 %v1129
    %1993 = vmatpush1.msra.mxu0 %v1128
    %1994 = vmatprep.subr.mxu0 %v1121
    %1995 = vmatpush1.msra.mxu0 %v1120
    %1996 = vmatprep.subr.mxu0 %v1113
    %1997 = vmatpush1.msra.mxu0 %v1112
    %1998 = vmatprep.subr.mxu0 %v1105
    %1999 = vmatpush1.msra.mxu0 %v1104
    %2000 = vmatprep.subr.mxu0 %v1097
    %2001 = vmatpush1.msra.mxu0 %v1096
    %2002 = vmatprep.subr.mxu0 %v1089
    %2003 = vmatpush1.msra.mxu0 %v1088
    %2004 = vmatprep.subr.mxu0 %v1081
    %2005 = vmatpush1.msra.mxu0 %v1080
    %2006 = vmatprep.subr.mxu0 %v1073
    %2007 = vmatpush1.msra.mxu0 %v1072
    %2008 = vmatprep.subr.mxu0 %v1065
    %2009 = vmatpush1.msra.mxu0 %v1064
    %2010 = vmatprep.subr.mxu0 %v1057
    %2011 = vmatpush1.msra.mxu0 %v1056
    %2012 = vmatprep.subr.mxu0 %v1049
    %2013 = vmatpush1.msra.mxu0 %v1048
    %2014 = vmatprep.subr.mxu0 %v1041
    %2015 = vmatpush1.msra.mxu0 %v1040
    %2016 = vmatprep.subr.mxu0 %v1033
    %2017 = vmatpush1.msra.mxu0 %v1032
    %2018 = vmatprep.subr.mxu0 %v1025
    %2019 = vmatpush1.msra.mxu0 %v1024
    %2020 = vmatprep.subr.mxu0 %v1017
    %2021 = vmatpush1.msra.mxu0 %v1016
    %2022 = vmatprep.subr.mxu0 %v1265
    %2023 = vmatpush2.msra.mxu0 %v1264
    %2024 = vmatprep.subr.mxu0 %v1257
    %2025 = vmatpush2.msra.mxu0 %v1256
    %2026 = vmatprep.subr.mxu0 %v1249
    %2027 = vmatpush2.msra.mxu0 %v1248
    %2028 = vmatprep.subr.mxu0 %v1241
    %2029 = vmatpush2.msra.mxu0 %v1240
    %2030 = vmatprep.subr.mxu0 %v1233
    %2031 = vmatpush2.msra.mxu0 %v1232
    %2032 = vmatprep.subr.mxu0 %v1225
    %2033 = vmatpush2.msra.mxu0 %v1224
    %2034 = vmatprep.subr.mxu0 %v1217
    %2035 = vmatpush2.msra.mxu0 %v1216
    %2036 = vmatprep.subr.mxu0 %v1209
    %2037 = vmatpush2.msra.mxu0 %v1208
    %2038 = vmatprep.subr.mxu0 %v1201
    %2039 = vmatpush2.msra.mxu0 %v1200
    %2040 = vmatprep.subr.mxu0 %v1193
    %2041 = vmatpush2.msra.mxu0 %v1192
    %2042 = vmatprep.subr.mxu0 %v1185
    %2043 = vmatpush2.msra.mxu0 %v1184
    %2044 = vmatprep.subr.mxu0 %v1177
    %2045 = vmatpush2.msra.mxu0 %v1176
    %2046 = vmatprep.subr.mxu0 %v1169
    %2047 = vmatpush2.msra.mxu0 %v1168
    %2048 = vmatprep.subr.mxu0 %v1161
    %2049 = vmatpush2.msra.mxu0 %v1160
    %2050 = vmatprep.subr.mxu0 %v1153
    %2051 = vmatpush2.msra.mxu0 %v1152
    %2052 = vmatprep.subr.mxu0 %v1145
    %2053 = vmatpush2.msra.mxu0 %v1144
    %2054 = vmatprep.mubr.f32.mxu0 %v1007
    %2055 = vmatmul.mubr.f32.gmra.mxu0 %v1006
    %v2056 = vpop.f32.mrf.mxu0
    %v2057 = vadd.f32 %v1551, %v2056
    %v2058 = vpop.f32.mrf.mxu0
    %v2059 = vadd.f32 %v1555, %v2058
    %2060 = vdwg.mxu0
    %2061 = vmatprep.subr.mxu0 %v1393
    %2062 = vmatpush1.msra.mxu0 %v1392
    %2063 = vmatprep.subr.mxu0 %v1385
    %2064 = vmatpush1.msra.mxu0 %v1384
    %2065 = vmatprep.subr.mxu0 %v1377
    %2066 = vmatpush1.msra.mxu0 %v1376
    %2067 = vmatprep.subr.mxu0 %v1369
    %2068 = vmatpush1.msra.mxu0 %v1368
    %2069 = vmatprep.subr.mxu0 %v1361
    %2070 = vmatpush1.msra.mxu0 %v1360
    %2071 = vmatprep.subr.mxu0 %v1353
    %2072 = vmatpush1.msra.mxu0 %v1352
    %2073 = vmatprep.subr.mxu0 %v1345
    %2074 = vmatpush1.msra.mxu0 %v1344
    %2075 = vmatprep.subr.mxu0 %v1337
    %2076 = vmatpush1.msra.mxu0 %v1336
    %2077 = vmatprep.subr.mxu0 %v1329
    %2078 = vmatpush1.msra.mxu0 %v1328
    %2079 = vmatprep.subr.mxu0 %v1321
    %2080 = vmatpush1.msra.mxu0 %v1320
    %2081 = vmatprep.subr.mxu0 %v1313
    %2082 = vmatpush1.msra.mxu0 %v1312
    %2083 = vmatprep.subr.mxu0 %v1305
    %2084 = vmatpush1.msra.mxu0 %v1304
    %2085 = vmatprep.subr.mxu0 %v1297
    %2086 = vmatpush1.msra.mxu0 %v1296
    %2087 = vmatprep.subr.mxu0 %v1289
    %2088 = vmatpush1.msra.mxu0 %v1288
    %2089 = vmatprep.subr.mxu0 %v1281
    %2090 = vmatpush1.msra.mxu0 %v1280
    %2091 = vmatprep.subr.mxu0 %v1273
    %2092 = vmatpush1.msra.mxu0 %v1272
    %2093 = vmatprep.subr.mxu0 %v1521
    %2094 = vmatpush2.msra.mxu0 %v1520
    %2095 = vmatprep.subr.mxu0 %v1513
    %2096 = vmatpush2.msra.mxu0 %v1512
    %2097 = vmatprep.subr.mxu0 %v1505
    %2098 = vmatpush2.msra.mxu0 %v1504
    %2099 = vmatprep.subr.mxu0 %v1497
    %2100 = vmatpush2.msra.mxu0 %v1496
    %2101 = vmatprep.subr.mxu0 %v1489
    %2102 = vmatpush2.msra.mxu0 %v1488
    %2103 = vmatprep.subr.mxu0 %v1481
    %2104 = vmatpush2.msra.mxu0 %v1480
    %2105 = vmatprep.subr.mxu0 %v1473
    %2106 = vmatpush2.msra.mxu0 %v1472
    %2107 = vmatprep.subr.mxu0 %v1465
    %2108 = vmatpush2.msra.mxu0 %v1464
    %2109 = vmatprep.subr.mxu0 %v1457
    %2110 = vmatpush2.msra.mxu0 %v1456
    %2111 = vmatprep.subr.mxu0 %v1449
    %2112 = vmatpush2.msra.mxu0 %v1448
    %2113 = vmatprep.subr.mxu0 %v1441
    %2114 = vmatpush2.msra.mxu0 %v1440
    %2115 = vmatprep.subr.mxu0 %v1433
    %2116 = vmatpush2.msra.mxu0 %v1432
    %2117 = vmatprep.subr.mxu0 %v1425
    %2118 = vmatpush2.msra.mxu0 %v1424
    %2119 = vmatprep.subr.mxu0 %v1417
    %2120 = vmatpush2.msra.mxu0 %v1416
    %2121 = vmatprep.subr.mxu0 %v1409
    %2122 = vmatpush2.msra.mxu0 %v1408
    %2123 = vmatprep.subr.mxu0 %v1401
    %2124 = vmatpush2.msra.mxu0 %v1400
    %2125 = vmatprep.mubr.f32.mxu0 %v1009
    %2126 = vmatmul.mubr.f32.gmra.mxu0 %v1008
    %v2127 = vpop.f32.mrf.mxu0
    %v2128 = vadd.f32 %v2057, %v2127
    %v2129 = vpop.f32.mrf.mxu0
    %v2130 = vadd.f32 %v2059, %v2129
    %2131 = vdwg.mxu0
    %vm2132 = vcmp.gt.f32.partialorder %v1702, 0.0
    %vm2133 = vcmp.gt.f32.partialorder %v1704, 0.0
    %vm2134 = vcmp.gt.f32.partialorder %v1844, 0.0
    %vm2135 = vcmp.gt.f32.partialorder %v1846, 0.0
    %vm2136 = vcmp.gt.f32.partialorder %v1986, 0.0
    %vm2137 = vcmp.gt.f32.partialorder %v1988, 0.0
    %vm2138 = vcmp.gt.f32.partialorder %v2128, 0.0
    %vm2139 = vcmp.gt.f32.partialorder %v2130, 0.0
    %v2140 = vmul.f32 %v1702, 0.2
    %v2141 = vmul.f32 %v1704, 0.2
    %v2142 = vmul.f32 %v1844, 0.2
    %v2143 = vmul.f32 %v1846, 0.2
    %v2144 = vmul.f32 %v1986, 0.2
    %v2145 = vmul.f32 %v1988, 0.2
    %v2146 = vmul.f32 %v2128, 0.2
    %v2147 = vmul.f32 %v2130, 0.2
    %v2148 = vsel %vm2132, %v1702, %v2140
    %v2149 = vsel %vm2133, %v1704, %v2141
    %v2150 = vsel %vm2134, %v1844, %v2142
    %v2151 = vsel %vm2135, %v1846, %v2143
    %v2152 = vsel %vm2136, %v1986, %v2144
    %v2153 = vsel %vm2137, %v1988, %v2145
    %v2154 = vsel %vm2138, %v2128, %v2146
    %v2155 = vsel %vm2139, %v2130, %v2147
    %v2164 = vcombine.low %v2148, %v2149
    %v2165 = vcombine.low %v2150, %v2151
    %v2167 = vunpack.c.l.s4 1983009808
    %v2168 = vunpack.c.0.s8 %v2167
    %v2169 = vlaneseq
    %v2170 = vshrl.u32 %v2169, 7
    %v2171 = vsub.s32 %v2168, %v2170
    %v2172 = vrot.slane %v2164, %v2171
    %v2174 = vunpack.c.l.s4 1983009808
    %v2175 = vunpack.c.0.s8 %v2174
    %v2176 = vlaneseq
    %v2177 = vshrl.u32 %v2176, 7
    %v2178 = vsub.s32 %v2175, %v2177
    %v2179 = vrot.slane %v2165, %v2178
    %v2180 = vcombine.low %v2172, %v2179
    %v2181 = vcombine.low %v2152, %v2153
    %v2182 = vcombine.low %v2154, %v2155
    %v2184 = vunpack.c.l.s4 1983009808
    %v2185 = vunpack.c.0.s8 %v2184
    %v2186 = vlaneseq
    %v2187 = vshrl.u32 %v2186, 7
    %v2188 = vsub.s32 %v2185, %v2187
    %v2189 = vrot.slane %v2181, %v2188
    %v2191 = vunpack.c.l.s4 1983009808
    %v2192 = vunpack.c.0.s8 %v2191
    %v2193 = vlaneseq
    %v2194 = vshrl.u32 %v2193, 7
    %v2195 = vsub.s32 %v2192, %v2194
    %v2196 = vrot.slane %v2182, %v2195
    %v2197 = vcombine.low %v2189, %v2196
    %2200 = vst [vmem:[#allocation26] sm:$0xff] %v2180
    %2201 = vst [vmem:[#allocation26 + $0x8] sm:$0xff] %v2197
    // Predicated region
    $region122: #{tpu_custom_call.1} parent=1 // pred_check
      _
    $region123: #{tpu_custom_call.1} parent=1 // pred_check_branch
      %2203 = sbr.rel (0) target = $region125
    $region124: #{tpu_custom_call.1} parent=1 // pred_region
      %s2205 = ssub.s32 256, 256
      %2206 = vsyncadd [#allocation4], %s2205
      %s2208 = sshll.u32 [#allocation26], 4
      %s2209 = int_to_ptr.vmem [resolvable:$true] %s2208
      %2211 = dma.vmem_to_hbm [thread:$0]  %s2209, 256, %s15, [#allocation4]
    $region125: #{tpu_custom_call.1} parent=1 // pred_fallthru
      _
    // Predicated region
    $region126: #{tpu_custom_call.1} parent=1 // pred_check
      _
    $region127: #{tpu_custom_call.1} parent=1 // pred_check_branch
      %2213 = sbr.rel (0) target = $region129
    $region128: #{tpu_custom_call.1} parent=1 // pred_region
      %2214 = dma.done [#allocation4], 256
    $region129: #{tpu_custom_call.1} parent=1 // pred_fallthru
      _
    %2215 = vsyncpa [#allocation3], 1
    %2216 = vsyncpa [#allocation6], 1
    %2217 = vsyncpa [#allocation9], 1
    %2218 = vsyncpa [#allocation12], 1
    %2219 = vsyncpa [#allocation15], 1
    %2220 = vsyncpa [#allocation18], 1
    %2221 = vsyncpa [#allocation21], 1
    %2222 = vsyncpa [#allocation24], 1
    %2223 = vsyncpa [#allocation4], 1

</llo_original>
